<compile_context>
chip_gen: v6e
topology: v6e:2x2x1
jax: 0.10.0
libtpu: 0.0.40
codegen_flags: <defaults>
</compile_context>

<pallas_src>
import functools

import jax
import jax.numpy as jnp
from jax import lax
from jax.experimental import pallas as pl
from jax.experimental.pallas import tpu as pltpu

PROJ_DIM = 256                      # ProjectionHead projection_dim (fc expects 1008 = 8*126)
CONV_OUT = 8
CONV_K = 5
CONV_LEN = PROJ_DIM - CONV_K + 1    # 252
POOL_LEN = CONV_LEN // 2            # 126
FLAT_DIM = CONV_OUT * POOL_LEN      # 1008
FLAT_PAD = 1024                     # 8 * 128 lanes (zero-padded tail)
CLS_PAD = 128                       # padded class lanes for dense stores
TILE_B = 8                          # batch tile (sublane multiple)


# ---------------------------------------------------------------------------
# Pallas kernel: fused conv-as-matmul head + softmax + CE, one batch tile.
# ---------------------------------------------------------------------------
def _brainclip_cls_kernel(x_ref, wconv_ref, bias_ref, fcw_ref, fcb_ref,
                          label_ref, probs_ref, perex_ref, *, num_classes):
    # One MXU call produces both the even and the odd conv positions:
    #   y[:, :1024]  = even-t conv outputs (flatten order o*126 + p, padded)
    #   y[:, 1024:]  = odd-t  conv outputs
    y = jnp.dot(x_ref[...], wconv_ref[...], preferred_element_type=jnp.float32)

    bias = bias_ref[...]                                  # (1, FLAT_PAD), pad cols = 0
    x_even = jnp.maximum(y[:, :FLAT_PAD] + bias, 0.0)     # ReLU
    x_odd = jnp.maximum(y[:, FLAT_PAD:] + bias, 0.0)
    pooled = jnp.maximum(x_even, x_odd)                   # MaxPool1d(2) + Flatten

    # bcls_fc: Linear(1008, num_classes)  (padded rows/cols of fc are zero)
    z = jnp.dot(pooled, fcw_ref[...], preferred_element_type=jnp.float32) + fcb_ref[...]

    # Mask out the padded class lanes for both softmaxes.
    mask = lax.broadcasted_iota(jnp.int32, z.shape, 1) < num_classes
    neg = jnp.float32(-1e30)

    # bcls_softmax: Softmax(dim=1)
    zm = jnp.where(mask, z, neg)
    z_max = jnp.max(zm, axis=1, keepdims=True)
    e = jnp.where(mask, jnp.exp(z - z_max), 0.0)
    probs = e / jnp.sum(e, axis=1, keepdims=True)         # padded lanes exactly 0
    probs_ref[...] = probs                                # lane-dense (TILE_B, 128) store

    # classification_loss: nn.CrossEntropyLoss()(softmax_out, one-hot label)
    # (double softmax, exactly as the PyTorch module does).
    p = jnp.where(mask, probs, neg)
    p_max = jnp.max(p, axis=1, keepdims=True)
    e2 = jnp.where(mask, jnp.exp(probs - p_max), 0.0)
    lse = p_max + jnp.log(jnp.sum(e2, axis=1, keepdims=True))
    log_sm = probs - lse
    per_ex = -jnp.sum(label_ref[...] * log_sm, axis=1, keepdims=True)   # (TILE_B, 1)
    # Broadcast across lanes so the store is unmasked / lane-dense.
    perex_ref[...] = jnp.broadcast_to(per_ex, perex_ref.shape)


# ---------------------------------------------------------------------------
# One-time parameter prep: build Toeplitz matrices, fold projections into them,
# fuse even/odd, pad everything to lane-aligned shapes.
# ---------------------------------------------------------------------------
def _build_conv_toeplitz(w_c, offset):
    """w_c: (CONV_OUT, CONV_K) weights of one input channel.
    Returns (PROJ_DIM, FLAT_PAD) matrix A with
      A[2p + offset + k, o*POOL_LEN + p] = w_c[o, k]; padded columns are 0."""
    o = jnp.arange(CONV_OUT)[:, None, None]
    p = jnp.arange(POOL_LEN)[None, :, None]
    k = jnp.arange(CONV_K)[None, None, :]
    rows = jnp.broadcast_to(2 * p + offset + k, (CONV_OUT, POOL_LEN, CONV_K)).ravel()
    cols = jnp.broadcast_to(o * POOL_LEN + p, (CONV_OUT, POOL_LEN, CONV_K)).ravel()
    vals = jnp.broadcast_to(w_c[:, None, :], (CONV_OUT, POOL_LEN, CONV_K)).ravel()
    A = jnp.zeros((PROJ_DIM, FLAT_PAD), jnp.float32)
    return A.at[rows, cols].set(vals)


def prepare_head_params(params):
    """Runs ONCE (off the hot path). Folds ProjectionHead weights into the
    conv Toeplitz matrices and pads everything to lane-aligned shapes."""
    a_ie = _build_conv_toeplitz(params["conv_w"][:, 0, :], 0)   # image channel, even t
    a_io = _build_conv_toeplitz(params["conv_w"][:, 0, :], 1)   # image channel, odd t
    a_te = _build_conv_toeplitz(params["conv_w"][:, 1, :], 0)   # text channel,  even t
    a_to = _build_conv_toeplitz(params["conv_w"][:, 1, :], 1)   # text channel,  odd t

    # Fold projections: x_even = i_f @ (proj_img @ A_ie) + t_f @ (proj_txt @ A_te)
    m_e = jnp.concatenate([params["proj_img"] @ a_ie, params["proj_txt"] @ a_te], axis=0)
    m_o = jnp.concatenate([params["proj_img"] @ a_io, params["proj_txt"] @ a_to], axis=0)
    w_conv = jnp.concatenate([m_e, m_o], axis=1)                 # (E_img+E_txt, 2*FLAT_PAD)

    conv_bias = jnp.zeros((1, FLAT_PAD), jnp.float32)
    conv_bias = conv_bias.at[0, :FLAT_DIM].set(jnp.repeat(params["conv_b"], POOL_LEN))

    num_classes = int(params["fc_w"].shape[0])
    fc_wT = jnp.zeros((FLAT_PAD, CLS_PAD), jnp.float32)
    fc_wT = fc_wT.at[:FLAT_DIM, :num_classes].set(params["fc_w"].T)
    fc_b = jnp.zeros((1, CLS_PAD), jnp.float32)
    fc_b = fc_b.at[0, :num_classes].set(params["fc_b"])

    # NOTE: on v6e/v7x w_conv / fc_wT / activations could be cast to bf16
    # (f32 accumulation) to halve DMA bytes; kept f32 here to hold the
    # 1e-4 correctness tolerance against the f32 reference.
    return dict(w_conv=w_conv, conv_bias=conv_bias, fc_wT=fc_wT, fc_b=fc_b,
                num_classes=num_classes)


# ---------------------------------------------------------------------------
# Wrapper: pad batch, tile over it, call pallas_call with resident weights.
# ---------------------------------------------------------------------------
def brainclip_classifier_head(i_f, t_f, head, label, inference=False, tile_b=TILE_B):
    B = i_f.shape[0]
    C = head["num_classes"]

    x = jnp.concatenate([i_f, t_f], axis=1).astype(jnp.float32)   # (B, E_img+E_txt)
    K = x.shape[1]
    B_pad = ((B + tile_b - 1) // tile_b) * tile_b
    if B_pad != B:
        x = jnp.pad(x, ((0, B_pad - B), (0, 0)))
    label_pad = jnp.zeros((B_pad, CLS_PAD), jnp.float32)
    label_pad = label_pad.at[:B, :C].set(label.astype(jnp.float32))

    kernel = functools.partial(_brainclip_cls_kernel, num_classes=C)
    grid = (B_pad // tile_b,)

    probs_pad, per_ex = pl.pallas_call(
        kernel,
        out_shape=(jax.ShapeDtypeStruct((B_pad, CLS_PAD), jnp.float32),
                   jax.ShapeDtypeStruct((B_pad, CLS_PAD), jnp.float32)),
        grid_spec=pltpu.PrefetchScalarGridSpec(
            num_scalar_prefetch=0, grid=grid,
            in_specs=[
                pl.BlockSpec((tile_b, K), lambda b: (b, 0)),            # x tile
                pl.BlockSpec((K, 2 * FLAT_PAD), lambda b: (0, 0)),      # fused conv weights (resident)
                pl.BlockSpec((1, FLAT_PAD), lambda b: (0, 0)),          # conv bias (resident)
                pl.BlockSpec((FLAT_PAD, CLS_PAD), lambda b: (0, 0)),    # fc weights (resident)
                pl.BlockSpec((1, CLS_PAD), lambda b: (0, 0)),           # fc bias (resident)
                pl.BlockSpec((tile_b, CLS_PAD), lambda b: (b, 0)),      # label tile
            ],
            out_specs=(pl.BlockSpec((tile_b, CLS_PAD), lambda b: (b, 0)),
                       pl.BlockSpec((tile_b, CLS_PAD), lambda b: (b, 0)))),
        compiler_params=pltpu.CompilerParams(
            dimension_semantics=("parallel",),
            vmem_limit_bytes=32 * 1024 * 1024),
    )(x, head["w_conv"], head["conv_bias"], head["fc_wT"], head["fc_b"], label_pad)

    if inference:
        return probs_pad[:B, :C]
    # Padded rows have all-zero labels -> exactly zero contribution; mean over real B.
    return jnp.sum(per_ex[:B, 0]) / B


# ---------------------------------------------------------------------------
# TODO(synk): image_encoder / text_encoder are external modules not defined in
# the source file; simple deterministic stand-ins (avg-pool + linear, and
# masked-mean embedding + linear) are used here, in plain JAX glue.
# ---------------------------------------------------------------------------
def image_encoder(image, w, b):
    # image: (B, C, H, W) NCHW
    feat = jnp.mean(image, axis=(2, 3))           # (B, C)
    return feat @ w + b                           # (B, E_IMG)


def text_encoder(input_ids, attention_mask, emb_table, w, b):
    emb = emb_table[input_ids]                    # (B, S, D)
    m = attention_mask[..., None].astype(emb.dtype)
    feat = jnp.sum(emb * m, axis=1) / jnp.maximum(jnp.sum(m, axis=1), 1.0)
    return feat @ w + b                           # (B, E_TXT)


# ---------------------------------------------------------------------------
# Pure-JAX reference of the classifier head (for correctness checking).
# ---------------------------------------------------------------------------
def reference_head(i_f, t_f, params, label):
    w_i = i_f @ params["proj_img"]
    w_t = t_f @ params["proj_txt"]
    feats = jnp.stack([w_i, w_t], axis=1)                               # (B, 2, 256)
    y = lax.conv_general_dilated(feats, params["conv_w"], (1,), "VALID",
                                 dimension_numbers=("NCH", "OIH", "NCH"))
    y = y + params["conv_b"][None, :, None]
    y = jnp.maximum(y, 0.0)
    y = y.reshape(y.shape[0], CONV_OUT, POOL_LEN, 2).max(axis=-1)
    flat = y.reshape(y.shape[0], FLAT_DIM)
    z = flat @ params["fc_w"].T + params["fc_b"]
    probs = jax.nn.softmax(z, axis=1)
    log_sm = jax.nn.log_softmax(probs, axis=1)
    loss = -jnp.mean(jnp.sum(label * log_sm, axis=1))
    return loss, probs


if __name__ == "__main__":
    key = jax.random.PRNGKey(0)
    B, CIMG, H, W = 2, 4, 16, 16
    S, VOCAB, D_TXT = 8, 50, 16
    E_IMG, E_TXT = 32, 48
    NUM_CLASSES = 5

    ks = jax.random.split(key, 16)
    image = jax.random.normal(ks[0], (B, CIMG, H, W), jnp.float32)
    input_ids = jax.random.randint(ks[1], (B, S), 0, VOCAB)
    attn_mask = (jax.random.uniform(ks[2], (B, S)) > 0.2).astype(jnp.float32)
    label_idx = jax.random.randint(ks[3], (B,), 0, NUM_CLASSES)
    label = jax.nn.one_hot(label_idx, NUM_CLASSES, dtype=jnp.float32)

    # Synthetic encoder parameters (deterministic).
    w_img_enc = 0.05 * jax.random.normal(ks[4], (CIMG, E_IMG), jnp.float32)
    b_img_enc = jnp.zeros((E_IMG,), jnp.float32)
    emb_table = 0.05 * jax.random.normal(ks[5], (VOCAB, D_TXT), jnp.float32)
    w_txt_enc = 0.05 * jax.random.normal(ks[6], (D_TXT, E_TXT), jnp.float32)
    b_txt_enc = jnp.zeros((E_TXT,), jnp.float32)

    # BrainCLIPClassifier parameters (deterministic, shapes from __init__).
    params = dict(
        proj_img=0.05 * jax.random.normal(ks[7], (E_IMG, PROJ_DIM), jnp.float32),
        proj_txt=0.05 * jax.random.normal(ks[8], (E_TXT, PROJ_DIM), jnp.float32),
        conv_w=0.2 * jax.random.normal(ks[9], (CONV_OUT, 2, CONV_K), jnp.float32),
        conv_b=0.1 * jax.random.normal(ks[10], (CONV_OUT,), jnp.float32),
        fc_w=0.05 * jax.random.normal(ks[11], (NUM_CLASSES, FLAT_DIM), jnp.float32),
        fc_b=0.05 * jax.random.normal(ks[12], (NUM_CLASSES,), jnp.float32),
    )

    i_f = image_encoder(image, w_img_enc, b_img_enc)
    t_f = text_encoder(input_ids, attn_mask, emb_table, w_txt_enc, b_txt_enc)

    # One-time prep (folded / padded weights), then the Pallas hot path.
    head = prepare_head_params(params)
    loss = brainclip_classifier_head(i_f, t_f, head, label, inference=False)
    loss = jax.block_until_ready(loss)

    ref_loss, ref_probs = reference_head(i_f, t_f, params, label)
    assert jnp.allclose(loss, ref_loss, atol=1e-4, rtol=1e-4), (loss, ref_loss)

    probs = brainclip_classifier_head(i_f, t_f, head, label, inference=True)
    probs = jax.block_until_ready(probs)
    assert jnp.allclose(probs, ref_probs, atol=1e-4, rtol=1e-4)

    print("KERNEL_OK")
</pallas_src>

<mosaic_0001>
module attributes {stable_mosaic.version = 11 : i64} {
  func.func @_brainclip_cls_kernel(%arg0: i32, %arg1: memref<8x80xf32, #tpu.memory_space<vmem>>, %arg2: memref<80x2048xf32, #tpu.memory_space<vmem>>, %arg3: memref<1x1024xf32, #tpu.memory_space<vmem>>, %arg4: memref<1024x128xf32, #tpu.memory_space<vmem>>, %arg5: memref<1x128xf32, #tpu.memory_space<vmem>>, %arg6: memref<8x128xf32, #tpu.memory_space<vmem>>, %arg7: memref<8x128xf32, #tpu.memory_space<vmem>>, %arg8: memref<8x128xf32, #tpu.memory_space<vmem>>) attributes {dimension_semantics = [#tpu.dimension_semantics<parallel>], iteration_bounds = array<i64: 1>, scalar_prefetch = 0 : i64, scratch_operands = 0 : i64, tpu.core_type = #tpu.core_type<tc>, window_params = [{transform_indices = @transform_0, window_bounds = array<i64: 8, 80>}, {pipeline_mode = #tpu.pipeline_mode<synchronous>, transform_indices = @transform_1, window_bounds = array<i64: 80, 2048>}, {pipeline_mode = #tpu.pipeline_mode<synchronous>, transform_indices = @transform_2, window_bounds = array<i64: 1, 1024>}, {pipeline_mode = #tpu.pipeline_mode<synchronous>, transform_indices = @transform_3, window_bounds = array<i64: 1024, 128>}, {pipeline_mode = #tpu.pipeline_mode<synchronous>, transform_indices = @transform_4, window_bounds = array<i64: 1, 128>}, {transform_indices = @transform_5, window_bounds = array<i64: 8, 128>}, {transform_indices = @transform_6, window_bounds = array<i64: 8, 128>}, {transform_indices = @transform_7, window_bounds = array<i64: 8, 128>}]} {
    %c0 = arith.constant 0 : index
    %c0_0 = arith.constant 0 : index
    %0 = vector.load %arg1[%c0, %c0_0] : memref<8x80xf32, #tpu.memory_space<vmem>>, vector<8x80xf32>
    %c0_1 = arith.constant 0 : index
    %c0_2 = arith.constant 0 : index
    %1 = vector.load %arg2[%c0_1, %c0_2] : memref<80x2048xf32, #tpu.memory_space<vmem>>, vector<80x2048xf32>
    %cst = arith.constant dense<0.000000e+00> : vector<8x2048xf32>
    %2 = tpu.matmul %0, %1, %cst {dimension_numbers = #tpu.dot_dimension_numbers<[1], [0], [0], [1], [0, 0, 1, 1], [], []>} : vector<8x80xf32>, vector<80x2048xf32>, vector<8x2048xf32> -> vector<8x2048xf32>
    %c0_3 = arith.constant 0 : index
    %c0_4 = arith.constant 0 : index
    %3 = vector.load %arg3[%c0_3, %c0_4] : memref<1x1024xf32, #tpu.memory_space<vmem>>, vector<1x1024xf32>
    %4 = vector.extract_strided_slice %2 {offsets = [0, 0], sizes = [8, 1024], strides = [1, 1]} : vector<8x2048xf32> to vector<8x1024xf32>
    %5 = vector.broadcast %3 : vector<1x1024xf32> to vector<8x1024xf32>
    %6 = arith.addf %4, %5 : vector<8x1024xf32>
    %cst_5 = arith.constant 0.000000e+00 : f32
    %7 = vector.broadcast %cst_5 : f32 to vector<8x1024xf32>
    %8 = arith.maximumf %6, %7 : vector<8x1024xf32>
    %9 = vector.extract_strided_slice %2 {offsets = [0, 1024], sizes = [8, 1024], strides = [1, 1]} : vector<8x2048xf32> to vector<8x1024xf32>
    %10 = vector.broadcast %3 : vector<1x1024xf32> to vector<8x1024xf32>
    %11 = arith.addf %9, %10 : vector<8x1024xf32>
    %cst_6 = arith.constant 0.000000e+00 : f32
    %12 = vector.broadcast %cst_6 : f32 to vector<8x1024xf32>
    %13 = arith.maximumf %11, %12 : vector<8x1024xf32>
    %14 = arith.maximumf %8, %13 : vector<8x1024xf32>
    %c0_7 = arith.constant 0 : index
    %c0_8 = arith.constant 0 : index
    %15 = vector.load %arg4[%c0_7, %c0_8] : memref<1024x128xf32, #tpu.memory_space<vmem>>, vector<1024x128xf32>
    %cst_9 = arith.constant dense<0.000000e+00> : vector<8x128xf32>
    %16 = tpu.matmul %14, %15, %cst_9 {dimension_numbers = #tpu.dot_dimension_numbers<[1], [0], [0], [1], [0, 0, 1, 1], [], []>} : vector<8x1024xf32>, vector<1024x128xf32>, vector<8x128xf32> -> vector<8x128xf32>
    %c0_10 = arith.constant 0 : index
    %c0_11 = arith.constant 0 : index
    %17 = vector.load %arg5[%c0_10, %c0_11] : memref<1x128xf32, #tpu.memory_space<vmem>>, vector<1x128xf32>
    %18 = vector.broadcast %17 : vector<1x128xf32> to vector<8x128xf32>
    %19 = arith.addf %16, %18 : vector<8x128xf32>
    %20 = tpu.iota {dimensions = array<i32: 1>} : vector<8x128xi32>
    %c5_i32 = arith.constant 5 : i32
    %21 = vector.broadcast %c5_i32 : i32 to vector<8x128xi32>
    %22 = arith.cmpi slt, %20, %21 : vector<8x128xi32>
    %cst_12 = arith.constant -1.000000e+30 : f32
    %23 = vector.broadcast %cst_12 : f32 to vector<8x128xf32>
    %24 = arith.select %22, %19, %23 : vector<8x128xi1>, vector<8x128xf32>
    %cst_13 = arith.constant dense<0xFF800000> : vector<8xf32>
    %25 = vector.multi_reduction <maximumf>, %24, %cst_13 [1] : vector<8x128xf32> to vector<8xf32>
    %26 = vector.shape_cast %25 : vector<8xf32> to vector<8x1xf32>
    %27 = vector.broadcast %26 : vector<8x1xf32> to vector<8x128xf32>
    %28 = arith.subf %19, %27 : vector<8x128xf32>
    %29 = math.exp %28 : vector<8x128xf32>
    %cst_14 = arith.constant 0.000000e+00 : f32
    %30 = vector.broadcast %cst_14 : f32 to vector<8x128xf32>
    %31 = arith.select %22, %29, %30 : vector<8x128xi1>, vector<8x128xf32>
    %cst_15 = arith.constant dense<0.000000e+00> : vector<8xf32>
    %32 = vector.multi_reduction <add>, %31, %cst_15 [1] : vector<8x128xf32> to vector<8xf32>
    %33 = vector.shape_cast %32 : vector<8xf32> to vector<8x1xf32>
    %34 = vector.broadcast %33 : vector<8x1xf32> to vector<8x128xf32>
    %35 = arith.divf %31, %34 : vector<8x128xf32>
    %c0_16 = arith.constant 0 : index
    %c0_17 = arith.constant 0 : index
    %36 = vector.load %arg7[%c0_16, %c0_17] : memref<8x128xf32, #tpu.memory_space<vmem>>, vector<8x128xf32>
    tpu.vector_store %arg7[%c0_16, %c0_17], %35 {strides = array<i32>} : memref<8x128xf32, #tpu.memory_space<vmem>>, vector<8x128xf32>,
    %cst_18 = arith.constant -1.000000e+30 : f32
    %37 = vector.broadcast %cst_18 : f32 to vector<8x128xf32>
    %38 = arith.select %22, %35, %37 : vector<8x128xi1>, vector<8x128xf32>
    %cst_19 = arith.constant dense<0xFF800000> : vector<8xf32>
    %39 = vector.multi_reduction <maximumf>, %38, %cst_19 [1] : vector<8x128xf32> to vector<8xf32>
    %40 = vector.shape_cast %39 : vector<8xf32> to vector<8x1xf32>
    %41 = vector.broadcast %40 : vector<8x1xf32> to vector<8x128xf32>
    %42 = arith.subf %35, %41 : vector<8x128xf32>
    %43 = math.exp %42 : vector<8x128xf32>
    %cst_20 = arith.constant 0.000000e+00 : f32
    %44 = vector.broadcast %cst_20 : f32 to vector<8x128xf32>
    %45 = arith.select %22, %43, %44 : vector<8x128xi1>, vector<8x128xf32>
    %cst_21 = arith.constant dense<0.000000e+00> : vector<8xf32>
    %46 = vector.multi_reduction <add>, %45, %cst_21 [1] : vector<8x128xf32> to vector<8xf32>
    %47 = vector.shape_cast %46 : vector<8xf32> to vector<8x1xf32>
    %48 = math.log %47 : vector<8x1xf32>
    %49 = arith.addf %40, %48 : vector<8x1xf32>
    %50 = vector.broadcast %49 : vector<8x1xf32> to vector<8x128xf32>
    %51 = arith.subf %35, %50 : vector<8x128xf32>
    %c0_22 = arith.constant 0 : index
    %c0_23 = arith.constant 0 : index
    %52 = vector.load %arg6[%c0_22, %c0_23] : memref<8x128xf32, #tpu.memory_space<vmem>>, vector<8x128xf32>
    %53 = arith.mulf %52, %51 : vector<8x128xf32>
    %cst_24 = arith.constant dense<0.000000e+00> : vector<8xf32>
    %54 = vector.multi_reduction <add>, %53, %cst_24 [1] : vector<8x128xf32> to vector<8xf32>
    %55 = vector.shape_cast %54 : vector<8xf32> to vector<8x1xf32>
    %cst_25 = arith.constant 0.000000e+00 : f32
    %56 = vector.broadcast %cst_25 : f32 to vector<8x1xf32>
    %57 = arith.subf %56, %55 : vector<8x1xf32>
    %58 = vector.shape_cast %57 : vector<8x1xf32> to vector<8x1xf32>
    %59 = vector.broadcast %58 : vector<8x1xf32> to vector<8x128xf32>
    %c0_26 = arith.constant 0 : index
    %c0_27 = arith.constant 0 : index
    %60 = vector.load %arg8[%c0_26, %c0_27] : memref<8x128xf32, #tpu.memory_space<vmem>>, vector<8x128xf32>
    tpu.vector_store %arg8[%c0_26, %c0_27], %59 {strides = array<i32>} : memref<8x128xf32, #tpu.memory_space<vmem>>, vector<8x128xf32>,
    return
  }
  func.func @transform_0(%arg0: i32) -> (i32, i32) {
    %c0_i32 = arith.constant 0 : i32
    %c0_i32_0 = arith.constant 0 : i32
    return %arg0, %c0_i32 : i32, i32
  }
  func.func @transform_1(%arg0: i32) -> (i32, i32) {
    %c0_i32 = arith.constant 0 : i32
    %c0_i32_0 = arith.constant 0 : i32
    %c0_i32_1 = arith.constant 0 : i32
    return %c0_i32, %c0_i32_0 : i32, i32
  }
  func.func @transform_2(%arg0: i32) -> (i32, i32) {
    %c0_i32 = arith.constant 0 : i32
    %c0_i32_0 = arith.constant 0 : i32
    %c0_i32_1 = arith.constant 0 : i32
    return %c0_i32, %c0_i32_0 : i32, i32
  }
  func.func @transform_3(%arg0: i32) -> (i32, i32) {
    %c0_i32 = arith.constant 0 : i32
    %c0_i32_0 = arith.constant 0 : i32
    %c0_i32_1 = arith.constant 0 : i32
    return %c0_i32, %c0_i32_0 : i32, i32
  }
  func.func @transform_4(%arg0: i32) -> (i32, i32) {
    %c0_i32 = arith.constant 0 : i32
    %c0_i32_0 = arith.constant 0 : i32
    %c0_i32_1 = arith.constant 0 : i32
    return %c0_i32, %c0_i32_0 : i32, i32
  }
  func.func @transform_5(%arg0: i32) -> (i32, i32) {
    %c0_i32 = arith.constant 0 : i32
    %c0_i32_0 = arith.constant 0 : i32
    return %arg0, %c0_i32 : i32, i32
  }
  func.func @transform_6(%arg0: i32) -> (i32, i32) {
    %c0_i32 = arith.constant 0 : i32
    %c0_i32_0 = arith.constant 0 : i32
    return %arg0, %c0_i32 : i32, i32
  }
  func.func @transform_7(%arg0: i32) -> (i32, i32) {
    %c0_i32 = arith.constant 0 : i32
    %c0_i32_0 = arith.constant 0 : i32
    return %arg0, %c0_i32 : i32, i32
  }
}

</mosaic_0001>

<llo_original>
// kernel: tpu_custom_call.1
$region0: #{tpu_custom_call.1}
  #allocation0 [shape = 'u32[]', space=smem, size = 0x4, offset = 0x4, fixed_abs, tag = 'smem constant byte address 0x4 - core index']
  #allocation1 [shape = 'u32[144,128]{1,0:T(1,128)}', space=vmem, size = 0x12000, scoped, tag = 'internal scratch']
  %s0 = inlined_call_operand.hbm [shape: f32[8,80], index: 0, kind: input, shape index: {}]
  %s1 = inlined_call_operand.hbm [shape: f32[80,2048], index: 1, kind: input, shape index: {}]
  %s2 = inlined_call_operand.hbm [shape: f32[1,1024], index: 2, kind: input, shape index: {}]
  %s3 = inlined_call_operand.hbm [shape: f32[1024,128], index: 3, kind: input, shape index: {}]
  %s4 = inlined_call_operand.vmem [shape: f32[1,128], index: 4, kind: input, shape index: {}]
  %s5 = inlined_call_operand.vmem [shape: f32[8,128], index: 5, kind: input, shape index: {}]
  %s6 = inlined_call_operand.hbm [shape: f32[8,128], index: 6, kind: output, shape index: {0}]
  %s7 = inlined_call_operand.hbm [shape: f32[8,128], index: 7, kind: output, shape index: {1}]
  %8 = xla_tuple %s6, %s7
  %s9 = sld [smem:[#allocation0]]
  $region58: #{tpu_custom_call.1} parent=0
    _
  %s11 = ssub.s32 1, %s9
  %s12 = scalar_select 0, %s11, %s9
  $region1: #{tpu_custom_call.1} parent=0
    #allocation2 [shape = 'u8[4096]{0}', space=vmem, size = 0x1000, scoped, tag = 'input window, operand 0, single buffered']
    #allocation3 [shape = 's32[1]{0}', space=sflag, size = 0x4, scoped, tag = 'scoped memory for tpu_custom_call.1']
    #allocation4 [shape = 's32[1]{0}', space=sflag, size = 0x4, scoped, tag = 'scoped memory for tpu_custom_call.1']
    #allocation5 [shape = 'u8[655360]{0}', space=vmem, size = 0xa0000, scoped, tag = 'input window, operand 1, single buffered']
    #allocation6 [shape = 's32[1]{0}', space=sflag, size = 0x4, scoped, tag = 'scoped memory for tpu_custom_call.1']
    #allocation7 [shape = 'u8[4096]{0}', space=vmem, size = 0x1000, scoped, tag = 'input window, operand 2, single buffered']
    #allocation8 [shape = 'u8[524288]{0}', space=vmem, size = 0x80000, scoped, tag = 'input window, operand 3, single buffered']
    #allocation9 [shape = 's32[1]{0}', space=sflag, size = 0x4, scoped, tag = 'scoped memory for tpu_custom_call.1']
    #allocation10 [shape = 'u8[4096]{0}', space=vmem, size = 0x1000, scoped, tag = 'output window, operand 0, single buffered']
    #allocation11 [shape = 'u8[4096]{0}', space=vmem, size = 0x1000, scoped, tag = 'output window, operand 1, single buffered']
    #allocation12 [shape = 's32[1]{0}', space=sflag, size = 0x4, scoped, tag = 'scoped memory for tpu_custom_call.1']
    %13 = vsyncpa [#allocation3], 0
    %14 = vsyncpa [#allocation6], 0
    %15 = vsyncpa [#allocation9], 0
    %16 = vsyncpa [#allocation4], 0
    %17 = vsyncpa [#allocation12], 0
    // Predicated region
    $region2: #{tpu_custom_call.1} parent=1 // pred_check
      _
    $region3: #{tpu_custom_call.1} parent=1 // pred_check_branch
      %19 = sbr.rel (0) target = $region5
    $region4: #{tpu_custom_call.1} parent=1 // pred_region
      %s21 = ssub.s32 128, 128
      %22 = vsyncadd [#allocation3], %s21
      %s24 = sshll.u32 [#allocation2], 4
      %s25 = int_to_ptr.vmem [resolvable:$true] %s24
      %27 = dma.hbm_to_vmem [thread:$0]  %s0, 128, %s25, [#allocation3]
    $region5: #{tpu_custom_call.1} parent=1 // pred_fallthru
      _
    // Predicated region
    $region6: #{tpu_custom_call.1} parent=1 // pred_check
      _
    $region7: #{tpu_custom_call.1} parent=1 // pred_check_branch
      %29 = sbr.rel (0) target = $region9
    $region8: #{tpu_custom_call.1} parent=1 // pred_region
      %s31 = ssub.s32 20480, 20480
      %32 = vsyncadd [#allocation6], %s31
      %s33 = sshll.u32 [#allocation5], 4
      %s34 = int_to_ptr.vmem [resolvable:$true] %s33
      %39 = dma.hbm_to_vmem [thread:$0]  %s1, 20480, %s34, [#allocation6], 2048, 2048, 128
    $region9: #{tpu_custom_call.1} parent=1 // pred_fallthru
      _
    // Predicated region
    $region10: #{tpu_custom_call.1} parent=1 // pred_check
      _
    $region11: #{tpu_custom_call.1} parent=1 // pred_check_branch
      %41 = sbr.rel (0) target = $region13
    $region12: #{tpu_custom_call.1} parent=1 // pred_region
      %s43 = ssub.s32 128, 128
      %44 = vsyncadd [#allocation6], %s43
      %s46 = sshll.u32 [#allocation7], 4
      %s47 = int_to_ptr.vmem [resolvable:$true] %s46
      %49 = dma.hbm_to_vmem [thread:$0]  %s2, 128, %s47, [#allocation6]
    $region13: #{tpu_custom_call.1} parent=1 // pred_fallthru
      _
    // Predicated region
    $region14: #{tpu_custom_call.1} parent=1 // pred_check
      _
    $region15: #{tpu_custom_call.1} parent=1 // pred_check_branch
      %51 = sbr.rel (0) target = $region17
    $region16: #{tpu_custom_call.1} parent=1 // pred_region
      %s53 = ssub.s32 16384, 16384
      %54 = vsyncadd [#allocation9], %s53
      %s55 = sshll.u32 [#allocation8], 4
      %s56 = int_to_ptr.vmem [resolvable:$true] %s55
      %61 = dma.hbm_to_vmem [thread:$0]  %s3, 16384, %s56, [#allocation9], 128, 128, 8
    $region17: #{tpu_custom_call.1} parent=1 // pred_fallthru
      _
    // Predicated region
    $region18: #{tpu_custom_call.1} parent=1 // pred_check
      _
    $region19: #{tpu_custom_call.1} parent=1 // pred_check_branch
      %63 = sbr.rel (0) target = $region21
    $region20: #{tpu_custom_call.1} parent=1 // pred_region
      _
    $region21: #{tpu_custom_call.1} parent=1 // pred_fallthru
      _
    // Predicated region
    $region22: #{tpu_custom_call.1} parent=1 // pred_check
      _
    $region23: #{tpu_custom_call.1} parent=1 // pred_check_branch
      %65 = sbr.rel (0) target = $region25
    $region24: #{tpu_custom_call.1} parent=1 // pred_region
      _
    $region25: #{tpu_custom_call.1} parent=1 // pred_fallthru
      _
    // Predicated region
    $region26: #{tpu_custom_call.1} parent=1 // pred_check
      _
    $region27: #{tpu_custom_call.1} parent=1 // pred_check_branch
      %67 = sbr.rel (0) target = $region29
    $region28: #{tpu_custom_call.1} parent=1 // pred_region
      %68 = dma.done [#allocation3], 128
    $region29: #{tpu_custom_call.1} parent=1 // pred_fallthru
      _
    // Predicated region
    $region30: #{tpu_custom_call.1} parent=1 // pred_check
      _
    $region31: #{tpu_custom_call.1} parent=1 // pred_check_branch
      %70 = sbr.rel (0) target = $region33
    $region32: #{tpu_custom_call.1} parent=1 // pred_region
      %71 = dma.done [#allocation6], 20480
    $region33: #{tpu_custom_call.1} parent=1 // pred_fallthru
      _
    // Predicated region
    $region34: #{tpu_custom_call.1} parent=1 // pred_check
      _
    $region35: #{tpu_custom_call.1} parent=1 // pred_check_branch
      %73 = sbr.rel (0) target = $region37
    $region36: #{tpu_custom_call.1} parent=1 // pred_region
      %74 = dma.done [#allocation6], 128
    $region37: #{tpu_custom_call.1} parent=1 // pred_fallthru
      _
    // Predicated region
    $region38: #{tpu_custom_call.1} parent=1 // pred_check
      _
    $region39: #{tpu_custom_call.1} parent=1 // pred_check_branch
      %76 = sbr.rel (0) target = $region41
    $region40: #{tpu_custom_call.1} parent=1 // pred_region
      %77 = dma.done [#allocation9], 16384
    $region41: #{tpu_custom_call.1} parent=1 // pred_fallthru
      _
    %v78 = vld [vmem:[#allocation2] sm:$0xff]
    %v79 = vld [vmem:[#allocation5] sm:$0xff]
    %v80 = vld [vmem:[#allocation5 + $0x8] sm:$0xff]
    %v81 = vld [vmem:[#allocation5 + $0x10] sm:$0xff]
    %v82 = vld [vmem:[#allocation5 + $0x18] sm:$0xff]
    %v83 = vld [vmem:[#allocation5 + $0x20] sm:$0xff]
    %v84 = vld [vmem:[#allocation5 + $0x28] sm:$0xff]
    %v85 = vld [vmem:[#allocation5 + $0x30] sm:$0xff]
    %v86 = vld [vmem:[#allocation5 + $0x38] sm:$0xff]
    %v87 = vld [vmem:[#allocation5 + $0x40] sm:$0xff]
    %v88 = vld [vmem:[#allocation5 + $0x48] sm:$0xff]
    %v89 = vld [vmem:[#allocation5 + $0x50] sm:$0xff]
    %v90 = vld [vmem:[#allocation5 + $0x58] sm:$0xff]
    %v91 = vld [vmem:[#allocation5 + $0x60] sm:$0xff]
    %v92 = vld [vmem:[#allocation5 + $0x68] sm:$0xff]
    %v93 = vld [vmem:[#allocation5 + $0x70] sm:$0xff]
    %v94 = vld [vmem:[#allocation5 + $0x78] sm:$0xff]
    %v95 = vld [vmem:[#allocation5 + $0x80] sm:$0xff]
    %v96 = vld [vmem:[#allocation5 + $0x88] sm:$0xff]
    %v97 = vld [vmem:[#allocation5 + $0x90] sm:$0xff]
    %v98 = vld [vmem:[#allocation5 + $0x98] sm:$0xff]
    %v99 = vld [vmem:[#allocation5 + $0xa0] sm:$0xff]
    %v100 = vld [vmem:[#allocation5 + $0xa8] sm:$0xff]
    %v101 = vld [vmem:[#allocation5 + $0xb0] sm:$0xff]
    %v102 = vld [vmem:[#allocation5 + $0xb8] sm:$0xff]
    %v103 = vld [vmem:[#allocation5 + $0xc0] sm:$0xff]
    %v104 = vld [vmem:[#allocation5 + $0xc8] sm:$0xff]
    %v105 = vld [vmem:[#allocation5 + $0xd0] sm:$0xff]
    %v106 = vld [vmem:[#allocation5 + $0xd8] sm:$0xff]
    %v107 = vld [vmem:[#allocation5 + $0xe0] sm:$0xff]
    %v108 = vld [vmem:[#allocation5 + $0xe8] sm:$0xff]
    %v109 = vld [vmem:[#allocation5 + $0xf0] sm:$0xff]
    %v110 = vld [vmem:[#allocation5 + $0xf8] sm:$0xff]
    %v111 = vld [vmem:[#allocation5 + $0x100] sm:$0xff]
    %v112 = vld [vmem:[#allocation5 + $0x108] sm:$0xff]
    %v113 = vld [vmem:[#allocation5 + $0x110] sm:$0xff]
    %v114 = vld [vmem:[#allocation5 + $0x118] sm:$0xff]
    %v115 = vld [vmem:[#allocation5 + $0x120] sm:$0xff]
    %v116 = vld [vmem:[#allocation5 + $0x128] sm:$0xff]
    %v117 = vld [vmem:[#allocation5 + $0x130] sm:$0xff]
    %v118 = vld [vmem:[#allocation5 + $0x138] sm:$0xff]
    %v119 = vld [vmem:[#allocation5 + $0x140] sm:$0xff]
    %v120 = vld [vmem:[#allocation5 + $0x148] sm:$0xff]
    %v121 = vld [vmem:[#allocation5 + $0x150] sm:$0xff]
    %v122 = vld [vmem:[#allocation5 + $0x158] sm:$0xff]
    %v123 = vld [vmem:[#allocation5 + $0x160] sm:$0xff]
    %v124 = vld [vmem:[#allocation5 + $0x168] sm:$0xff]
    %v125 = vld [vmem:[#allocation5 + $0x170] sm:$0xff]
    %v126 = vld [vmem:[#allocation5 + $0x178] sm:$0xff]
    %v127 = vld [vmem:[#allocation5 + $0x180] sm:$0xff]
    %v128 = vld [vmem:[#allocation5 + $0x188] sm:$0xff]
    %v129 = vld [vmem:[#allocation5 + $0x190] sm:$0xff]
    %v130 = vld [vmem:[#allocation5 + $0x198] sm:$0xff]
    %v131 = vld [vmem:[#allocation5 + $0x1a0] sm:$0xff]
    %v132 = vld [vmem:[#allocation5 + $0x1a8] sm:$0xff]
    %v133 = vld [vmem:[#allocation5 + $0x1b0] sm:$0xff]
    %v134 = vld [vmem:[#allocation5 + $0x1b8] sm:$0xff]
    %v135 = vld [vmem:[#allocation5 + $0x1c0] sm:$0xff]
    %v136 = vld [vmem:[#allocation5 + $0x1c8] sm:$0xff]
    %v137 = vld [vmem:[#allocation5 + $0x1d0] sm:$0xff]
    %v138 = vld [vmem:[#allocation5 + $0x1d8] sm:$0xff]
    %v139 = vld [vmem:[#allocation5 + $0x1e0] sm:$0xff]
    %v140 = vld [vmem:[#allocation5 + $0x1e8] sm:$0xff]
    %v141 = vld [vmem:[#allocation5 + $0x1f0] sm:$0xff]
    %v142 = vld [vmem:[#allocation5 + $0x1f8] sm:$0xff]
    %v143 = vld [vmem:[#allocation5 + $0x200] sm:$0xff]
    %v144 = vld [vmem:[#allocation5 + $0x208] sm:$0xff]
    %v145 = vld [vmem:[#allocation5 + $0x210] sm:$0xff]
    %v146 = vld [vmem:[#allocation5 + $0x218] sm:$0xff]
    %v147 = vld [vmem:[#allocation5 + $0x220] sm:$0xff]
    %v148 = vld [vmem:[#allocation5 + $0x228] sm:$0xff]
    %v149 = vld [vmem:[#allocation5 + $0x230] sm:$0xff]
    %v150 = vld [vmem:[#allocation5 + $0x238] sm:$0xff]
    %v151 = vld [vmem:[#allocation5 + $0x240] sm:$0xff]
    %v152 = vld [vmem:[#allocation5 + $0x248] sm:$0xff]
    %v153 = vld [vmem:[#allocation5 + $0x250] sm:$0xff]
    %v154 = vld [vmem:[#allocation5 + $0x258] sm:$0xff]
    %v155 = vld [vmem:[#allocation5 + $0x260] sm:$0xff]
    %v156 = vld [vmem:[#allocation5 + $0x268] sm:$0xff]
    %v157 = vld [vmem:[#allocation5 + $0x270] sm:$0xff]
    %v158 = vld [vmem:[#allocation5 + $0x278] sm:$0xff]
    %v159 = vld [vmem:[#allocation5 + $0x280] sm:$0xff]
    %v160 = vld [vmem:[#allocation5 + $0x288] sm:$0xff]
    %v161 = vld [vmem:[#allocation5 + $0x290] sm:$0xff]
    %v162 = vld [vmem:[#allocation5 + $0x298] sm:$0xff]
    %v163 = vld [vmem:[#allocation5 + $0x2a0] sm:$0xff]
    %v164 = vld [vmem:[#allocation5 + $0x2a8] sm:$0xff]
    %v165 = vld [vmem:[#allocation5 + $0x2b0] sm:$0xff]
    %v166 = vld [vmem:[#allocation5 + $0x2b8] sm:$0xff]
    %v167 = vld [vmem:[#allocation5 + $0x2c0] sm:$0xff]
    %v168 = vld [vmem:[#allocation5 + $0x2c8] sm:$0xff]
    %v169 = vld [vmem:[#allocation5 + $0x2d0] sm:$0xff]
    %v170 = vld [vmem:[#allocation5 + $0x2d8] sm:$0xff]
    %v171 = vld [vmem:[#allocation5 + $0x2e0] sm:$0xff]
    %v172 = vld [vmem:[#allocation5 + $0x2e8] sm:$0xff]
    %v173 = vld [vmem:[#allocation5 + $0x2f0] sm:$0xff]
    %v174 = vld [vmem:[#allocation5 + $0x2f8] sm:$0xff]
    %v175 = vld [vmem:[#allocation5 + $0x300] sm:$0xff]
    %v176 = vld [vmem:[#allocation5 + $0x308] sm:$0xff]
    %v177 = vld [vmem:[#allocation5 + $0x310] sm:$0xff]
    %v178 = vld [vmem:[#allocation5 + $0x318] sm:$0xff]
    %v179 = vld [vmem:[#allocation5 + $0x320] sm:$0xff]
    %v180 = vld [vmem:[#allocation5 + $0x328] sm:$0xff]
    %v181 = vld [vmem:[#allocation5 + $0x330] sm:$0xff]
    %v182 = vld [vmem:[#allocation5 + $0x338] sm:$0xff]
    %v183 = vld [vmem:[#allocation5 + $0x340] sm:$0xff]
    %v184 = vld [vmem:[#allocation5 + $0x348] sm:$0xff]
    %v185 = vld [vmem:[#allocation5 + $0x350] sm:$0xff]
    %v186 = vld [vmem:[#allocation5 + $0x358] sm:$0xff]
    %v187 = vld [vmem:[#allocation5 + $0x360] sm:$0xff]
    %v188 = vld [vmem:[#allocation5 + $0x368] sm:$0xff]
    %v189 = vld [vmem:[#allocation5 + $0x370] sm:$0xff]
    %v190 = vld [vmem:[#allocation5 + $0x378] sm:$0xff]
    %v191 = vld [vmem:[#allocation5 + $0x380] sm:$0xff]
    %v192 = vld [vmem:[#allocation5 + $0x388] sm:$0xff]
    %v193 = vld [vmem:[#allocation5 + $0x390] sm:$0xff]
    %v194 = vld [vmem:[#allocation5 + $0x398] sm:$0xff]
    %v195 = vld [vmem:[#allocation5 + $0x3a0] sm:$0xff]
    %v196 = vld [vmem:[#allocation5 + $0x3a8] sm:$0xff]
    %v197 = vld [vmem:[#allocation5 + $0x3b0] sm:$0xff]
    %v198 = vld [vmem:[#allocation5 + $0x3b8] sm:$0xff]
    %v199 = vld [vmem:[#allocation5 + $0x3c0] sm:$0xff]
    %v200 = vld [vmem:[#allocation5 + $0x3c8] sm:$0xff]
    %v201 = vld [vmem:[#allocation5 + $0x3d0] sm:$0xff]
    %v202 = vld [vmem:[#allocation5 + $0x3d8] sm:$0xff]
    %v203 = vld [vmem:[#allocation5 + $0x3e0] sm:$0xff]
    %v204 = vld [vmem:[#allocation5 + $0x3e8] sm:$0xff]
    %v205 = vld [vmem:[#allocation5 + $0x3f0] sm:$0xff]
    %v206 = vld [vmem:[#allocation5 + $0x3f8] sm:$0xff]
    %v207 = vld [vmem:[#allocation5 + $0x400] sm:$0xff]
    %v208 = vld [vmem:[#allocation5 + $0x408] sm:$0xff]
    %v209 = vld [vmem:[#allocation5 + $0x410] sm:$0xff]
    %v210 = vld [vmem:[#allocation5 + $0x418] sm:$0xff]
    %v211 = vld [vmem:[#allocation5 + $0x420] sm:$0xff]
    %v212 = vld [vmem:[#allocation5 + $0x428] sm:$0xff]
    %v213 = vld [vmem:[#allocation5 + $0x430] sm:$0xff]
    %v214 = vld [vmem:[#allocation5 + $0x438] sm:$0xff]
    %v215 = vld [vmem:[#allocation5 + $0x440] sm:$0xff]
    %v216 = vld [vmem:[#allocation5 + $0x448] sm:$0xff]
    %v217 = vld [vmem:[#allocation5 + $0x450] sm:$0xff]
    %v218 = vld [vmem:[#allocation5 + $0x458] sm:$0xff]
    %v219 = vld [vmem:[#allocation5 + $0x460] sm:$0xff]
    %v220 = vld [vmem:[#allocation5 + $0x468] sm:$0xff]
    %v221 = vld [vmem:[#allocation5 + $0x470] sm:$0xff]
    %v222 = vld [vmem:[#allocation5 + $0x478] sm:$0xff]
    %v223 = vld [vmem:[#allocation5 + $0x480] sm:$0xff]
    %v224 = vld [vmem:[#allocation5 + $0x488] sm:$0xff]
    %v225 = vld [vmem:[#allocation5 + $0x490] sm:$0xff]
    %v226 = vld [vmem:[#allocation5 + $0x498] sm:$0xff]
    %v227 = vld [vmem:[#allocation5 + $0x4a0] sm:$0xff]
    %v228 = vld [vmem:[#allocation5 + $0x4a8] sm:$0xff]
    %v229 = vld [vmem:[#allocation5 + $0x4b0] sm:$0xff]
    %v230 = vld [vmem:[#allocation5 + $0x4b8] sm:$0xff]
    %v231 = vld [vmem:[#allocation5 + $0x4c0] sm:$0xff]
    %v232 = vld [vmem:[#allocation5 + $0x4c8] sm:$0xff]
    %v233 = vld [vmem:[#allocation5 + $0x4d0] sm:$0xff]
    %v234 = vld [vmem:[#allocation5 + $0x4d8] sm:$0xff]
    %v235 = vld [vmem:[#allocation5 + $0x4e0] sm:$0xff]
    %v236 = vld [vmem:[#allocation5 + $0x4e8] sm:$0xff]
    %v237 = vld [vmem:[#allocation5 + $0x4f0] sm:$0xff]
    %v238 = vld [vmem:[#allocation5 + $0x4f8] sm:$0xff]
    %vm239 = vcmask 654336
    %v241 = vsel %vm239, %v78, 0
    %243 = vmatprep.subr.mxu0 0.0
    %244 = vmatpush1.msra.mxu0 0.0
    %245 = vmatprep.subr.mxu0 0.0
    %246 = vmatpush1.msra.mxu0 0.0
    %247 = vmatprep.subr.mxu0 0.0
    %248 = vmatpush1.msra.mxu0 0.0
    %249 = vmatprep.subr.mxu0 0.0
    %250 = vmatpush1.msra.mxu0 0.0
    %251 = vmatprep.subr.mxu0 0.0
    %252 = vmatpush1.msra.mxu0 0.0
    %253 = vmatprep.subr.mxu0 0.0
    %254 = vmatpush1.msra.mxu0 0.0
    %255 = vmatprep.subr.mxu0 %v224
    %256 = vmatpush1.msra.mxu0 %v223
    %257 = vmatprep.subr.mxu0 %v208
    %258 = vmatpush1.msra.mxu0 %v207
    %259 = vmatprep.subr.mxu0 %v192
    %260 = vmatpush1.msra.mxu0 %v191
    %261 = vmatprep.subr.mxu0 %v176
    %262 = vmatpush1.msra.mxu0 %v175
    %263 = vmatprep.subr.mxu0 %v160
    %264 = vmatpush1.msra.mxu0 %v159
    %265 = vmatprep.subr.mxu0 %v144
    %266 = vmatpush1.msra.mxu0 %v143
    %267 = vmatprep.subr.mxu0 %v128
    %268 = vmatpush1.msra.mxu0 %v127
    %269 = vmatprep.subr.mxu0 %v112
    %270 = vmatpush1.msra.mxu0 %v111
    %271 = vmatprep.subr.mxu0 %v96
    %272 = vmatpush1.msra.mxu0 %v95
    %273 = vmatprep.subr.mxu0 %v80
    %274 = vmatpush1.msra.mxu0 %v79
    %275 = vmatprep.subr.mxu0 0.0
    %276 = vmatpush2.msra.mxu0 0.0
    %277 = vmatprep.subr.mxu0 0.0
    %278 = vmatpush2.msra.mxu0 0.0
    %279 = vmatprep.subr.mxu0 0.0
    %280 = vmatpush2.msra.mxu0 0.0
    %281 = vmatprep.subr.mxu0 0.0
    %282 = vmatpush2.msra.mxu0 0.0
    %283 = vmatprep.subr.mxu0 0.0
    %284 = vmatpush2.msra.mxu0 0.0
    %285 = vmatprep.subr.mxu0 0.0
    %286 = vmatpush2.msra.mxu0 0.0
    %287 = vmatprep.subr.mxu0 0.0
    %288 = vmatpush2.msra.mxu0 0.0
    %289 = vmatprep.subr.mxu0 0.0
    %290 = vmatpush2.msra.mxu0 0.0
    %291 = vmatprep.subr.mxu0 0.0
    %292 = vmatpush2.msra.mxu0 0.0
    %293 = vmatprep.subr.mxu0 0.0
    %294 = vmatpush2.msra.mxu0 0.0
    %295 = vmatprep.subr.mxu0 0.0
    %296 = vmatpush2.msra.mxu0 0.0
    %297 = vmatprep.subr.mxu0 0.0
    %298 = vmatpush2.msra.mxu0 0.0
    %299 = vmatprep.subr.mxu0 0.0
    %300 = vmatpush2.msra.mxu0 0.0
    %301 = vmatprep.subr.mxu0 0.0
    %302 = vmatpush2.msra.mxu0 0.0
    %303 = vmatprep.subr.mxu0 0.0
    %304 = vmatpush2.msra.mxu0 0.0
    %305 = vmatprep.subr.mxu0 0.0
    %306 = vmatpush2.msra.mxu0 0.0
    %307 = vmatprep.mubr.f32.mxu0 0.0
    %308 = vmatmul.mubr.f32.gmra.mxu0 %v241
    %v309 = vpop.f32.mrf.mxu0
    %v310 = vadd.f32 0.0, %v309
    %v311 = vpop.f32.mrf.mxu0
    %v312 = vadd.f32 0.0, %v311
    %313 = vdwg.mxu0
    %314 = vmatprep.subr.mxu0 0.0
    %315 = vmatpush1.msra.mxu0 0.0
    %316 = vmatprep.subr.mxu0 0.0
    %317 = vmatpush1.msra.mxu0 0.0
    %318 = vmatprep.subr.mxu0 0.0
    %319 = vmatpush1.msra.mxu0 0.0
    %320 = vmatprep.subr.mxu0 0.0
    %321 = vmatpush1.msra.mxu0 0.0
    %322 = vmatprep.subr.mxu0 0.0
    %323 = vmatpush1.msra.mxu0 0.0
    %324 = vmatprep.subr.mxu0 0.0
    %325 = vmatpush1.msra.mxu0 0.0
    %326 = vmatprep.subr.mxu0 %v226
    %327 = vmatpush1.msra.mxu0 %v225
    %328 = vmatprep.subr.mxu0 %v210
    %329 = vmatpush1.msra.mxu0 %v209
    %330 = vmatprep.subr.mxu0 %v194
    %331 = vmatpush1.msra.mxu0 %v193
    %332 = vmatprep.subr.mxu0 %v178
    %333 = vmatpush1.msra.mxu0 %v177
    %334 = vmatprep.subr.mxu0 %v162
    %335 = vmatpush1.msra.mxu0 %v161
    %336 = vmatprep.subr.mxu0 %v146
    %337 = vmatpush1.msra.mxu0 %v145
    %338 = vmatprep.subr.mxu0 %v130
    %339 = vmatpush1.msra.mxu0 %v129
    %340 = vmatprep.subr.mxu0 %v114
    %341 = vmatpush1.msra.mxu0 %v113
    %342 = vmatprep.subr.mxu0 %v98
    %343 = vmatpush1.msra.mxu0 %v97
    %344 = vmatprep.subr.mxu0 %v82
    %345 = vmatpush1.msra.mxu0 %v81
    %346 = vmatprep.subr.mxu0 0.0
    %347 = vmatpush2.msra.mxu0 0.0
    %348 = vmatprep.subr.mxu0 0.0
    %349 = vmatpush2.msra.mxu0 0.0
    %350 = vmatprep.subr.mxu0 0.0
    %351 = vmatpush2.msra.mxu0 0.0
    %352 = vmatprep.subr.mxu0 0.0
    %353 = vmatpush2.msra.mxu0 0.0
    %354 = vmatprep.subr.mxu0 0.0
    %355 = vmatpush2.msra.mxu0 0.0
    %356 = vmatprep.subr.mxu0 0.0
    %357 = vmatpush2.msra.mxu0 0.0
    %358 = vmatprep.subr.mxu0 0.0
    %359 = vmatpush2.msra.mxu0 0.0
    %360 = vmatprep.subr.mxu0 0.0
    %361 = vmatpush2.msra.mxu0 0.0
    %362 = vmatprep.subr.mxu0 0.0
    %363 = vmatpush2.msra.mxu0 0.0
    %364 = vmatprep.subr.mxu0 0.0
    %365 = vmatpush2.msra.mxu0 0.0
    %366 = vmatprep.subr.mxu0 0.0
    %367 = vmatpush2.msra.mxu0 0.0
    %368 = vmatprep.subr.mxu0 0.0
    %369 = vmatpush2.msra.mxu0 0.0
    %370 = vmatprep.subr.mxu0 0.0
    %371 = vmatpush2.msra.mxu0 0.0
    %372 = vmatprep.subr.mxu0 0.0
    %373 = vmatpush2.msra.mxu0 0.0
    %374 = vmatprep.subr.mxu0 0.0
    %375 = vmatpush2.msra.mxu0 0.0
    %376 = vmatprep.subr.mxu0 0.0
    %377 = vmatpush2.msra.mxu0 0.0
    %378 = vmatprep.mubr.f32.mxu0 0.0
    %379 = vmatmul.mubr.f32.gmra.mxu0 %v241
    %v380 = vpop.f32.mrf.mxu0
    %v381 = vadd.f32 0.0, %v380
    %v382 = vpop.f32.mrf.mxu0
    %v383 = vadd.f32 0.0, %v382
    %384 = vdwg.mxu0
    %385 = vmatprep.subr.mxu0 0.0
    %386 = vmatpush1.msra.mxu0 0.0
    %387 = vmatprep.subr.mxu0 0.0
    %388 = vmatpush1.msra.mxu0 0.0
    %389 = vmatprep.subr.mxu0 0.0
    %390 = vmatpush1.msra.mxu0 0.0
    %391 = vmatprep.subr.mxu0 0.0
    %392 = vmatpush1.msra.mxu0 0.0
    %393 = vmatprep.subr.mxu0 0.0
    %394 = vmatpush1.msra.mxu0 0.0
    %395 = vmatprep.subr.mxu0 0.0
    %396 = vmatpush1.msra.mxu0 0.0
    %397 = vmatprep.subr.mxu0 %v228
    %398 = vmatpush1.msra.mxu0 %v227
    %399 = vmatprep.subr.mxu0 %v212
    %400 = vmatpush1.msra.mxu0 %v211
    %401 = vmatprep.subr.mxu0 %v196
    %402 = vmatpush1.msra.mxu0 %v195
    %403 = vmatprep.subr.mxu0 %v180
    %404 = vmatpush1.msra.mxu0 %v179
    %405 = vmatprep.subr.mxu0 %v164
    %406 = vmatpush1.msra.mxu0 %v163
    %407 = vmatprep.subr.mxu0 %v148
    %408 = vmatpush1.msra.mxu0 %v147
    %409 = vmatprep.subr.mxu0 %v132
    %410 = vmatpush1.msra.mxu0 %v131
    %411 = vmatprep.subr.mxu0 %v116
    %412 = vmatpush1.msra.mxu0 %v115
    %413 = vmatprep.subr.mxu0 %v100
    %414 = vmatpush1.msra.mxu0 %v99
    %415 = vmatprep.subr.mxu0 %v84
    %416 = vmatpush1.msra.mxu0 %v83
    %417 = vmatprep.subr.mxu0 0.0
    %418 = vmatpush2.msra.mxu0 0.0
    %419 = vmatprep.subr.mxu0 0.0
    %420 = vmatpush2.msra.mxu0 0.0
    %421 = vmatprep.subr.mxu0 0.0
    %422 = vmatpush2.msra.mxu0 0.0
    %423 = vmatprep.subr.mxu0 0.0
    %424 = vmatpush2.msra.mxu0 0.0
    %425 = vmatprep.subr.mxu0 0.0
    %426 = vmatpush2.msra.mxu0 0.0
    %427 = vmatprep.subr.mxu0 0.0
    %428 = vmatpush2.msra.mxu0 0.0
    %429 = vmatprep.subr.mxu0 0.0
    %430 = vmatpush2.msra.mxu0 0.0
    %431 = vmatprep.subr.mxu0 0.0
    %432 = vmatpush2.msra.mxu0 0.0
    %433 = vmatprep.subr.mxu0 0.0
    %434 = vmatpush2.msra.mxu0 0.0
    %435 = vmatprep.subr.mxu0 0.0
    %436 = vmatpush2.msra.mxu0 0.0
    %437 = vmatprep.subr.mxu0 0.0
    %438 = vmatpush2.msra.mxu0 0.0
    %439 = vmatprep.subr.mxu0 0.0
    %440 = vmatpush2.msra.mxu0 0.0
    %441 = vmatprep.subr.mxu0 0.0
    %442 = vmatpush2.msra.mxu0 0.0
    %443 = vmatprep.subr.mxu0 0.0
    %444 = vmatpush2.msra.mxu0 0.0
    %445 = vmatprep.subr.mxu0 0.0
    %446 = vmatpush2.msra.mxu0 0.0
    %447 = vmatprep.subr.mxu0 0.0
    %448 = vmatpush2.msra.mxu0 0.0
    %449 = vmatprep.mubr.f32.mxu0 0.0
    %450 = vmatmul.mubr.f32.gmra.mxu0 %v241
    %v451 = vpop.f32.mrf.mxu0
    %v452 = vadd.f32 0.0, %v451
    %v453 = vpop.f32.mrf.mxu0
    %v454 = vadd.f32 0.0, %v453
    %455 = vdwg.mxu0
    %456 = vmatprep.subr.mxu0 0.0
    %457 = vmatpush1.msra.mxu0 0.0
    %458 = vmatprep.subr.mxu0 0.0
    %459 = vmatpush1.msra.mxu0 0.0
    %460 = vmatprep.subr.mxu0 0.0
    %461 = vmatpush1.msra.mxu0 0.0
    %462 = vmatprep.subr.mxu0 0.0
    %463 = vmatpush1.msra.mxu0 0.0
    %464 = vmatprep.subr.mxu0 0.0
    %465 = vmatpush1.msra.mxu0 0.0
    %466 = vmatprep.subr.mxu0 0.0
    %467 = vmatpush1.msra.mxu0 0.0
    %468 = vmatprep.subr.mxu0 %v230
    %469 = vmatpush1.msra.mxu0 %v229
    %470 = vmatprep.subr.mxu0 %v214
    %471 = vmatpush1.msra.mxu0 %v213
    %472 = vmatprep.subr.mxu0 %v198
    %473 = vmatpush1.msra.mxu0 %v197
    %474 = vmatprep.subr.mxu0 %v182
    %475 = vmatpush1.msra.mxu0 %v181
    %476 = vmatprep.subr.mxu0 %v166
    %477 = vmatpush1.msra.mxu0 %v165
    %478 = vmatprep.subr.mxu0 %v150
    %479 = vmatpush1.msra.mxu0 %v149
    %480 = vmatprep.subr.mxu0 %v134
    %481 = vmatpush1.msra.mxu0 %v133
    %482 = vmatprep.subr.mxu0 %v118
    %483 = vmatpush1.msra.mxu0 %v117
    %484 = vmatprep.subr.mxu0 %v102
    %485 = vmatpush1.msra.mxu0 %v101
    %486 = vmatprep.subr.mxu0 %v86
    %487 = vmatpush1.msra.mxu0 %v85
    %488 = vmatprep.subr.mxu0 0.0
    %489 = vmatpush2.msra.mxu0 0.0
    %490 = vmatprep.subr.mxu0 0.0
    %491 = vmatpush2.msra.mxu0 0.0
    %492 = vmatprep.subr.mxu0 0.0
    %493 = vmatpush2.msra.mxu0 0.0
    %494 = vmatprep.subr.mxu0 0.0
    %495 = vmatpush2.msra.mxu0 0.0
    %496 = vmatprep.subr.mxu0 0.0
    %497 = vmatpush2.msra.mxu0 0.0
    %498 = vmatprep.subr.mxu0 0.0
    %499 = vmatpush2.msra.mxu0 0.0
    %500 = vmatprep.subr.mxu0 0.0
    %501 = vmatpush2.msra.mxu0 0.0
    %502 = vmatprep.subr.mxu0 0.0
    %503 = vmatpush2.msra.mxu0 0.0
    %504 = vmatprep.subr.mxu0 0.0
    %505 = vmatpush2.msra.mxu0 0.0
    %506 = vmatprep.subr.mxu0 0.0
    %507 = vmatpush2.msra.mxu0 0.0
    %508 = vmatprep.subr.mxu0 0.0
    %509 = vmatpush2.msra.mxu0 0.0
    %510 = vmatprep.subr.mxu0 0.0
    %511 = vmatpush2.msra.mxu0 0.0
    %512 = vmatprep.subr.mxu0 0.0
    %513 = vmatpush2.msra.mxu0 0.0
    %514 = vmatprep.subr.mxu0 0.0
    %515 = vmatpush2.msra.mxu0 0.0
    %516 = vmatprep.subr.mxu0 0.0
    %517 = vmatpush2.msra.mxu0 0.0
    %518 = vmatprep.subr.mxu0 0.0
    %519 = vmatpush2.msra.mxu0 0.0
    %520 = vmatprep.mubr.f32.mxu0 0.0
    %521 = vmatmul.mubr.f32.gmra.mxu0 %v241
    %v522 = vpop.f32.mrf.mxu0
    %v523 = vadd.f32 0.0, %v522
    %v524 = vpop.f32.mrf.mxu0
    %v525 = vadd.f32 0.0, %v524
    %526 = vdwg.mxu0
    %527 = vmatprep.subr.mxu0 0.0
    %528 = vmatpush1.msra.mxu0 0.0
    %529 = vmatprep.subr.mxu0 0.0
    %530 = vmatpush1.msra.mxu0 0.0
    %531 = vmatprep.subr.mxu0 0.0
    %532 = vmatpush1.msra.mxu0 0.0
    %533 = vmatprep.subr.mxu0 0.0
    %534 = vmatpush1.msra.mxu0 0.0
    %535 = vmatprep.subr.mxu0 0.0
    %536 = vmatpush1.msra.mxu0 0.0
    %537 = vmatprep.subr.mxu0 0.0
    %538 = vmatpush1.msra.mxu0 0.0
    %539 = vmatprep.subr.mxu0 %v232
    %540 = vmatpush1.msra.mxu0 %v231
    %541 = vmatprep.subr.mxu0 %v216
    %542 = vmatpush1.msra.mxu0 %v215
    %543 = vmatprep.subr.mxu0 %v200
    %544 = vmatpush1.msra.mxu0 %v199
    %545 = vmatprep.subr.mxu0 %v184
    %546 = vmatpush1.msra.mxu0 %v183
    %547 = vmatprep.subr.mxu0 %v168
    %548 = vmatpush1.msra.mxu0 %v167
    %549 = vmatprep.subr.mxu0 %v152
    %550 = vmatpush1.msra.mxu0 %v151
    %551 = vmatprep.subr.mxu0 %v136
    %552 = vmatpush1.msra.mxu0 %v135
    %553 = vmatprep.subr.mxu0 %v120
    %554 = vmatpush1.msra.mxu0 %v119
    %555 = vmatprep.subr.mxu0 %v104
    %556 = vmatpush1.msra.mxu0 %v103
    %557 = vmatprep.subr.mxu0 %v88
    %558 = vmatpush1.msra.mxu0 %v87
    %559 = vmatprep.subr.mxu0 0.0
    %560 = vmatpush2.msra.mxu0 0.0
    %561 = vmatprep.subr.mxu0 0.0
    %562 = vmatpush2.msra.mxu0 0.0
    %563 = vmatprep.subr.mxu0 0.0
    %564 = vmatpush2.msra.mxu0 0.0
    %565 = vmatprep.subr.mxu0 0.0
    %566 = vmatpush2.msra.mxu0 0.0
    %567 = vmatprep.subr.mxu0 0.0
    %568 = vmatpush2.msra.mxu0 0.0
    %569 = vmatprep.subr.mxu0 0.0
    %570 = vmatpush2.msra.mxu0 0.0
    %571 = vmatprep.subr.mxu0 0.0
    %572 = vmatpush2.msra.mxu0 0.0
    %573 = vmatprep.subr.mxu0 0.0
    %574 = vmatpush2.msra.mxu0 0.0
    %575 = vmatprep.subr.mxu0 0.0
    %576 = vmatpush2.msra.mxu0 0.0
    %577 = vmatprep.subr.mxu0 0.0
    %578 = vmatpush2.msra.mxu0 0.0
    %579 = vmatprep.subr.mxu0 0.0
    %580 = vmatpush2.msra.mxu0 0.0
    %581 = vmatprep.subr.mxu0 0.0
    %582 = vmatpush2.msra.mxu0 0.0
    %583 = vmatprep.subr.mxu0 0.0
    %584 = vmatpush2.msra.mxu0 0.0
    %585 = vmatprep.subr.mxu0 0.0
    %586 = vmatpush2.msra.mxu0 0.0
    %587 = vmatprep.subr.mxu0 0.0
    %588 = vmatpush2.msra.mxu0 0.0
    %589 = vmatprep.subr.mxu0 0.0
    %590 = vmatpush2.msra.mxu0 0.0
    %591 = vmatprep.mubr.f32.mxu0 0.0
    %592 = vmatmul.mubr.f32.gmra.mxu0 %v241
    %v593 = vpop.f32.mrf.mxu0
    %v594 = vadd.f32 0.0, %v593
    %v595 = vpop.f32.mrf.mxu0
    %v596 = vadd.f32 0.0, %v595
    %597 = vdwg.mxu0
    %598 = vmatprep.subr.mxu0 0.0
    %599 = vmatpush1.msra.mxu0 0.0
    %600 = vmatprep.subr.mxu0 0.0
    %601 = vmatpush1.msra.mxu0 0.0
    %602 = vmatprep.subr.mxu0 0.0
    %603 = vmatpush1.msra.mxu0 0.0
    %604 = vmatprep.subr.mxu0 0.0
    %605 = vmatpush1.msra.mxu0 0.0
    %606 = vmatprep.subr.mxu0 0.0
    %607 = vmatpush1.msra.mxu0 0.0
    %608 = vmatprep.subr.mxu0 0.0
    %609 = vmatpush1.msra.mxu0 0.0
    %610 = vmatprep.subr.mxu0 %v234
    %611 = vmatpush1.msra.mxu0 %v233
    %612 = vmatprep.subr.mxu0 %v218
    %613 = vmatpush1.msra.mxu0 %v217
    %614 = vmatprep.subr.mxu0 %v202
    %615 = vmatpush1.msra.mxu0 %v201
    %616 = vmatprep.subr.mxu0 %v186
    %617 = vmatpush1.msra.mxu0 %v185
    %618 = vmatprep.subr.mxu0 %v170
    %619 = vmatpush1.msra.mxu0 %v169
    %620 = vmatprep.subr.mxu0 %v154
    %621 = vmatpush1.msra.mxu0 %v153
    %622 = vmatprep.subr.mxu0 %v138
    %623 = vmatpush1.msra.mxu0 %v137
    %624 = vmatprep.subr.mxu0 %v122
    %625 = vmatpush1.msra.mxu0 %v121
    %626 = vmatprep.subr.mxu0 %v106
    %627 = vmatpush1.msra.mxu0 %v105
    %628 = vmatprep.subr.mxu0 %v90
    %629 = vmatpush1.msra.mxu0 %v89
    %630 = vmatprep.subr.mxu0 0.0
    %631 = vmatpush2.msra.mxu0 0.0
    %632 = vmatprep.subr.mxu0 0.0
    %633 = vmatpush2.msra.mxu0 0.0
    %634 = vmatprep.subr.mxu0 0.0
    %635 = vmatpush2.msra.mxu0 0.0
    %636 = vmatprep.subr.mxu0 0.0
    %637 = vmatpush2.msra.mxu0 0.0
    %638 = vmatprep.subr.mxu0 0.0
    %639 = vmatpush2.msra.mxu0 0.0
    %640 = vmatprep.subr.mxu0 0.0
    %641 = vmatpush2.msra.mxu0 0.0
    %642 = vmatprep.subr.mxu0 0.0
    %643 = vmatpush2.msra.mxu0 0.0
    %644 = vmatprep.subr.mxu0 0.0
    %645 = vmatpush2.msra.mxu0 0.0
    %646 = vmatprep.subr.mxu0 0.0
    %647 = vmatpush2.msra.mxu0 0.0
    %648 = vmatprep.subr.mxu0 0.0
    %649 = vmatpush2.msra.mxu0 0.0
    %650 = vmatprep.subr.mxu0 0.0
    %651 = vmatpush2.msra.mxu0 0.0
    %652 = vmatprep.subr.mxu0 0.0
    %653 = vmatpush2.msra.mxu0 0.0
    %654 = vmatprep.subr.mxu0 0.0
    %655 = vmatpush2.msra.mxu0 0.0
    %656 = vmatprep.subr.mxu0 0.0
    %657 = vmatpush2.msra.mxu0 0.0
    %658 = vmatprep.subr.mxu0 0.0
    %659 = vmatpush2.msra.mxu0 0.0
    %660 = vmatprep.subr.mxu0 0.0
    %661 = vmatpush2.msra.mxu0 0.0
    %662 = vmatprep.mubr.f32.mxu0 0.0
    %663 = vmatmul.mubr.f32.gmra.mxu0 %v241
    %v664 = vpop.f32.mrf.mxu0
    %v665 = vadd.f32 0.0, %v664
    %v666 = vpop.f32.mrf.mxu0
    %v667 = vadd.f32 0.0, %v666
    %668 = vdwg.mxu0
    %669 = vmatprep.subr.mxu0 0.0
    %670 = vmatpush1.msra.mxu0 0.0
    %671 = vmatprep.subr.mxu0 0.0
    %672 = vmatpush1.msra.mxu0 0.0
    %673 = vmatprep.subr.mxu0 0.0
    %674 = vmatpush1.msra.mxu0 0.0
    %675 = vmatprep.subr.mxu0 0.0
    %676 = vmatpush1.msra.mxu0 0.0
    %677 = vmatprep.subr.mxu0 0.0
    %678 = vmatpush1.msra.mxu0 0.0
    %679 = vmatprep.subr.mxu0 0.0
    %680 = vmatpush1.msra.mxu0 0.0
    %681 = vmatprep.subr.mxu0 %v236
    %682 = vmatpush1.msra.mxu0 %v235
    %683 = vmatprep.subr.mxu0 %v220
    %684 = vmatpush1.msra.mxu0 %v219
    %685 = vmatprep.subr.mxu0 %v204
    %686 = vmatpush1.msra.mxu0 %v203
    %687 = vmatprep.subr.mxu0 %v188
    %688 = vmatpush1.msra.mxu0 %v187
    %689 = vmatprep.subr.mxu0 %v172
    %690 = vmatpush1.msra.mxu0 %v171
    %691 = vmatprep.subr.mxu0 %v156
    %692 = vmatpush1.msra.mxu0 %v155
    %693 = vmatprep.subr.mxu0 %v140
    %694 = vmatpush1.msra.mxu0 %v139
    %695 = vmatprep.subr.mxu0 %v124
    %696 = vmatpush1.msra.mxu0 %v123
    %697 = vmatprep.subr.mxu0 %v108
    %698 = vmatpush1.msra.mxu0 %v107
    %699 = vmatprep.subr.mxu0 %v92
    %700 = vmatpush1.msra.mxu0 %v91
    %701 = vmatprep.subr.mxu0 0.0
    %702 = vmatpush2.msra.mxu0 0.0
    %703 = vmatprep.subr.mxu0 0.0
    %704 = vmatpush2.msra.mxu0 0.0
    %705 = vmatprep.subr.mxu0 0.0
    %706 = vmatpush2.msra.mxu0 0.0
    %707 = vmatprep.subr.mxu0 0.0
    %708 = vmatpush2.msra.mxu0 0.0
    %709 = vmatprep.subr.mxu0 0.0
    %710 = vmatpush2.msra.mxu0 0.0
    %711 = vmatprep.subr.mxu0 0.0
    %712 = vmatpush2.msra.mxu0 0.0
    %713 = vmatprep.subr.mxu0 0.0
    %714 = vmatpush2.msra.mxu0 0.0
    %715 = vmatprep.subr.mxu0 0.0
    %716 = vmatpush2.msra.mxu0 0.0
    %717 = vmatprep.subr.mxu0 0.0
    %718 = vmatpush2.msra.mxu0 0.0
    %719 = vmatprep.subr.mxu0 0.0
    %720 = vmatpush2.msra.mxu0 0.0
    %721 = vmatprep.subr.mxu0 0.0
    %722 = vmatpush2.msra.mxu0 0.0
    %723 = vmatprep.subr.mxu0 0.0
    %724 = vmatpush2.msra.mxu0 0.0
    %725 = vmatprep.subr.mxu0 0.0
    %726 = vmatpush2.msra.mxu0 0.0
    %727 = vmatprep.subr.mxu0 0.0
    %728 = vmatpush2.msra.mxu0 0.0
    %729 = vmatprep.subr.mxu0 0.0
    %730 = vmatpush2.msra.mxu0 0.0
    %731 = vmatprep.subr.mxu0 0.0
    %732 = vmatpush2.msra.mxu0 0.0
    %733 = vmatprep.mubr.f32.mxu0 0.0
    %734 = vmatmul.mubr.f32.gmra.mxu0 %v241
    %v735 = vpop.f32.mrf.mxu0
    %v736 = vadd.f32 0.0, %v735
    %v737 = vpop.f32.mrf.mxu0
    %v738 = vadd.f32 0.0, %v737
    %739 = vdwg.mxu0
    %740 = vmatprep.subr.mxu0 0.0
    %741 = vmatpush1.msra.mxu0 0.0
    %742 = vmatprep.subr.mxu0 0.0
    %743 = vmatpush1.msra.mxu0 0.0
    %744 = vmatprep.subr.mxu0 0.0
    %745 = vmatpush1.msra.mxu0 0.0
    %746 = vmatprep.subr.mxu0 0.0
    %747 = vmatpush1.msra.mxu0 0.0
    %748 = vmatprep.subr.mxu0 0.0
    %749 = vmatpush1.msra.mxu0 0.0
    %750 = vmatprep.subr.mxu0 0.0
    %751 = vmatpush1.msra.mxu0 0.0
    %752 = vmatprep.subr.mxu0 %v238
    %753 = vmatpush1.msra.mxu0 %v237
    %754 = vmatprep.subr.mxu0 %v222
    %755 = vmatpush1.msra.mxu0 %v221
    %756 = vmatprep.subr.mxu0 %v206
    %757 = vmatpush1.msra.mxu0 %v205
    %758 = vmatprep.subr.mxu0 %v190
    %759 = vmatpush1.msra.mxu0 %v189
    %760 = vmatprep.subr.mxu0 %v174
    %761 = vmatpush1.msra.mxu0 %v173
    %762 = vmatprep.subr.mxu0 %v158
    %763 = vmatpush1.msra.mxu0 %v157
    %764 = vmatprep.subr.mxu0 %v142
    %765 = vmatpush1.msra.mxu0 %v141
    %766 = vmatprep.subr.mxu0 %v126
    %767 = vmatpush1.msra.mxu0 %v125
    %768 = vmatprep.subr.mxu0 %v110
    %769 = vmatpush1.msra.mxu0 %v109
    %770 = vmatprep.subr.mxu0 %v94
    %771 = vmatpush1.msra.mxu0 %v93
    %772 = vmatprep.subr.mxu0 0.0
    %773 = vmatpush2.msra.mxu0 0.0
    %774 = vmatprep.subr.mxu0 0.0
    %775 = vmatpush2.msra.mxu0 0.0
    %776 = vmatprep.subr.mxu0 0.0
    %777 = vmatpush2.msra.mxu0 0.0
    %778 = vmatprep.subr.mxu0 0.0
    %779 = vmatpush2.msra.mxu0 0.0
    %780 = vmatprep.subr.mxu0 0.0
    %781 = vmatpush2.msra.mxu0 0.0
    %782 = vmatprep.subr.mxu0 0.0
    %783 = vmatpush2.msra.mxu0 0.0
    %784 = vmatprep.subr.mxu0 0.0
    %785 = vmatpush2.msra.mxu0 0.0
    %786 = vmatprep.subr.mxu0 0.0
    %787 = vmatpush2.msra.mxu0 0.0
    %788 = vmatprep.subr.mxu0 0.0
    %789 = vmatpush2.msra.mxu0 0.0
    %790 = vmatprep.subr.mxu0 0.0
    %791 = vmatpush2.msra.mxu0 0.0
    %792 = vmatprep.subr.mxu0 0.0
    %793 = vmatpush2.msra.mxu0 0.0
    %794 = vmatprep.subr.mxu0 0.0
    %795 = vmatpush2.msra.mxu0 0.0
    %796 = vmatprep.subr.mxu0 0.0
    %797 = vmatpush2.msra.mxu0 0.0
    %798 = vmatprep.subr.mxu0 0.0
    %799 = vmatpush2.msra.mxu0 0.0
    %800 = vmatprep.subr.mxu0 0.0
    %801 = vmatpush2.msra.mxu0 0.0
    %802 = vmatprep.subr.mxu0 0.0
    %803 = vmatpush2.msra.mxu0 0.0
    %804 = vmatprep.mubr.f32.mxu0 0.0
    %805 = vmatmul.mubr.f32.gmra.mxu0 %v241
    %v806 = vpop.f32.mrf.mxu0
    %v807 = vadd.f32 0.0, %v806
    %v808 = vpop.f32.mrf.mxu0
    %v809 = vadd.f32 0.0, %v808
    %810 = vdwg.mxu0
    %v811 = vld [vmem:[#allocation7] sm:$0xff]
    %v813 = vlaneseq
    %v814 = vshrl.u32 %v813, 7
    %v815 = vsub.s32 0, %v814
    %v816 = vrot.slane %v811, %v815
    %v817 = vlaneseq
    %v818 = vshrl.u32 %v817, 7
    %v819 = vsub.s32 1, %v818
    %v820 = vrot.slane %v811, %v819
    %v821 = vlaneseq
    %v822 = vshrl.u32 %v821, 7
    %v823 = vsub.s32 2, %v822
    %v824 = vrot.slane %v811, %v823
    %v825 = vlaneseq
    %v826 = vshrl.u32 %v825, 7
    %v827 = vsub.s32 3, %v826
    %v828 = vrot.slane %v811, %v827
    %v829 = vlaneseq
    %v830 = vshrl.u32 %v829, 7
    %v831 = vsub.s32 4, %v830
    %v832 = vrot.slane %v811, %v831
    %v833 = vlaneseq
    %v834 = vshrl.u32 %v833, 7
    %v835 = vsub.s32 5, %v834
    %v836 = vrot.slane %v811, %v835
    %v837 = vlaneseq
    %v838 = vshrl.u32 %v837, 7
    %v839 = vsub.s32 6, %v838
    %v840 = vrot.slane %v811, %v839
    %v841 = vlaneseq
    %v842 = vshrl.u32 %v841, 7
    %v843 = vsub.s32 7, %v842
    %v844 = vrot.slane %v811, %v843
    %v853 = vadd.f32 %v310, %v816
    %v854 = vadd.f32 %v312, %v820
    %v855 = vadd.f32 %v381, %v824
    %v856 = vadd.f32 %v383, %v828
    %v857 = vadd.f32 %v452, %v832
    %v858 = vadd.f32 %v454, %v836
    %v859 = vadd.f32 %v523, %v840
    %v860 = vadd.f32 %v525, %v844
    %v861 = vmax.f32 %v853, 0.0
    %v862 = vmax.f32 %v854, 0.0
    %v863 = vmax.f32 %v855, 0.0
    %v864 = vmax.f32 %v856, 0.0
    %v865 = vmax.f32 %v857, 0.0
    %v866 = vmax.f32 %v858, 0.0
    %v867 = vmax.f32 %v859, 0.0
    %v868 = vmax.f32 %v860, 0.0
    %v869 = vadd.f32 %v594, %v816
    %v870 = vadd.f32 %v596, %v820
    %v871 = vadd.f32 %v665, %v824
    %v872 = vadd.f32 %v667, %v828
    %v873 = vadd.f32 %v736, %v832
    %v874 = vadd.f32 %v738, %v836
    %v875 = vadd.f32 %v807, %v840
    %v876 = vadd.f32 %v809, %v844
    %v877 = vmax.f32 %v869, 0.0
    %v878 = vmax.f32 %v870, 0.0
    %v879 = vmax.f32 %v871, 0.0
    %v880 = vmax.f32 %v872, 0.0
    %v881 = vmax.f32 %v873, 0.0
    %v882 = vmax.f32 %v874, 0.0
    %v883 = vmax.f32 %v875, 0.0
    %v884 = vmax.f32 %v876, 0.0
    %v885 = vmax.f32 %v861, %v877
    %v886 = vmax.f32 %v862, %v878
    %v887 = vmax.f32 %v863, %v879
    %v888 = vmax.f32 %v864, %v880
    %v889 = vmax.f32 %v865, %v881
    %v890 = vmax.f32 %v866, %v882
    %v891 = vmax.f32 %v867, %v883
    %v892 = vmax.f32 %v868, %v884
    %v893 = vld [vmem:[#allocation8] sm:$0xff]
    %v894 = vld [vmem:[#allocation8 + $0x8] sm:$0xff]
    %v895 = vld [vmem:[#allocation8 + $0x10] sm:$0xff]
    %v896 = vld [vmem:[#allocation8 + $0x18] sm:$0xff]
    %v897 = vld [vmem:[#allocation8 + $0x20] sm:$0xff]
    %v898 = vld [vmem:[#allocation8 + $0x28] sm:$0xff]
    %v899 = vld [vmem:[#allocation8 + $0x30] sm:$0xff]
    %v900 = vld [vmem:[#allocation8 + $0x38] sm:$0xff]
    %v901 = vld [vmem:[#allocation8 + $0x40] sm:$0xff]
    %v902 = vld [vmem:[#allocation8 + $0x48] sm:$0xff]
    %v903 = vld [vmem:[#allocation8 + $0x50] sm:$0xff]
    %v904 = vld [vmem:[#allocation8 + $0x58] sm:$0xff]
    %v905 = vld [vmem:[#allocation8 + $0x60] sm:$0xff]
    %v906 = vld [vmem:[#allocation8 + $0x68] sm:$0xff]
    %v907 = vld [vmem:[#allocation8 + $0x70] sm:$0xff]
    %v908 = vld [vmem:[#allocation8 + $0x78] sm:$0xff]
    %v909 = vld [vmem:[#allocation8 + $0x80] sm:$0xff]
    %v910 = vld [vmem:[#allocation8 + $0x88] sm:$0xff]
    %v911 = vld [vmem:[#allocation8 + $0x90] sm:$0xff]
    %v912 = vld [vmem:[#allocation8 + $0x98] sm:$0xff]
    %v913 = vld [vmem:[#allocation8 + $0xa0] sm:$0xff]
    %v914 = vld [vmem:[#allocation8 + $0xa8] sm:$0xff]
    %v915 = vld [vmem:[#allocation8 + $0xb0] sm:$0xff]
    %v916 = vld [vmem:[#allocation8 + $0xb8] sm:$0xff]
    %v917 = vld [vmem:[#allocation8 + $0xc0] sm:$0xff]
    %v918 = vld [vmem:[#allocation8 + $0xc8] sm:$0xff]
    %v919 = vld [vmem:[#allocation8 + $0xd0] sm:$0xff]
    %v920 = vld [vmem:[#allocation8 + $0xd8] sm:$0xff]
    %v921 = vld [vmem:[#allocation8 + $0xe0] sm:$0xff]
    %v922 = vld [vmem:[#allocation8 + $0xe8] sm:$0xff]
    %v923 = vld [vmem:[#allocation8 + $0xf0] sm:$0xff]
    %v924 = vld [vmem:[#allocation8 + $0xf8] sm:$0xff]
    %v925 = vld [vmem:[#allocation8 + $0x100] sm:$0xff]
    %v926 = vld [vmem:[#allocation8 + $0x108] sm:$0xff]
    %v927 = vld [vmem:[#allocation8 + $0x110] sm:$0xff]
    %v928 = vld [vmem:[#allocation8 + $0x118] sm:$0xff]
    %v929 = vld [vmem:[#allocation8 + $0x120] sm:$0xff]
    %v930 = vld [vmem:[#allocation8 + $0x128] sm:$0xff]
    %v931 = vld [vmem:[#allocation8 + $0x130] sm:$0xff]
    %v932 = vld [vmem:[#allocation8 + $0x138] sm:$0xff]
    %v933 = vld [vmem:[#allocation8 + $0x140] sm:$0xff]
    %v934 = vld [vmem:[#allocation8 + $0x148] sm:$0xff]
    %v935 = vld [vmem:[#allocation8 + $0x150] sm:$0xff]
    %v936 = vld [vmem:[#allocation8 + $0x158] sm:$0xff]
    %v937 = vld [vmem:[#allocation8 + $0x160] sm:$0xff]
    %v938 = vld [vmem:[#allocation8 + $0x168] sm:$0xff]
    %v939 = vld [vmem:[#allocation8 + $0x170] sm:$0xff]
    %v940 = vld [vmem:[#allocation8 + $0x178] sm:$0xff]
    %v941 = vld [vmem:[#allocation8 + $0x180] sm:$0xff]
    %v942 = vld [vmem:[#allocation8 + $0x188] sm:$0xff]
    %v943 = vld [vmem:[#allocation8 + $0x190] sm:$0xff]
    %v944 = vld [vmem:[#allocation8 + $0x198] sm:$0xff]
    %v945 = vld [vmem:[#allocation8 + $0x1a0] sm:$0xff]
    %v946 = vld [vmem:[#allocation8 + $0x1a8] sm:$0xff]
    %v947 = vld [vmem:[#allocation8 + $0x1b0] sm:$0xff]
    %v948 = vld [vmem:[#allocation8 + $0x1b8] sm:$0xff]
    %v949 = vld [vmem:[#allocation8 + $0x1c0] sm:$0xff]
    %v950 = vld [vmem:[#allocation8 + $0x1c8] sm:$0xff]
    %v951 = vld [vmem:[#allocation8 + $0x1d0] sm:$0xff]
    %v952 = vld [vmem:[#allocation8 + $0x1d8] sm:$0xff]
    %v953 = vld [vmem:[#allocation8 + $0x1e0] sm:$0xff]
    %v954 = vld [vmem:[#allocation8 + $0x1e8] sm:$0xff]
    %v955 = vld [vmem:[#allocation8 + $0x1f0] sm:$0xff]
    %v956 = vld [vmem:[#allocation8 + $0x1f8] sm:$0xff]
    %v957 = vld [vmem:[#allocation8 + $0x200] sm:$0xff]
    %v958 = vld [vmem:[#allocation8 + $0x208] sm:$0xff]
    %v959 = vld [vmem:[#allocation8 + $0x210] sm:$0xff]
    %v960 = vld [vmem:[#allocation8 + $0x218] sm:$0xff]
    %v961 = vld [vmem:[#allocation8 + $0x220] sm:$0xff]
    %v962 = vld [vmem:[#allocation8 + $0x228] sm:$0xff]
    %v963 = vld [vmem:[#allocation8 + $0x230] sm:$0xff]
    %v964 = vld [vmem:[#allocation8 + $0x238] sm:$0xff]
    %v965 = vld [vmem:[#allocation8 + $0x240] sm:$0xff]
    %v966 = vld [vmem:[#allocation8 + $0x248] sm:$0xff]
    %v967 = vld [vmem:[#allocation8 + $0x250] sm:$0xff]
    %v968 = vld [vmem:[#allocation8 + $0x258] sm:$0xff]
    %v969 = vld [vmem:[#allocation8 + $0x260] sm:$0xff]
    %v970 = vld [vmem:[#allocation8 + $0x268] sm:$0xff]
    %v971 = vld [vmem:[#allocation8 + $0x270] sm:$0xff]
    %v972 = vld [vmem:[#allocation8 + $0x278] sm:$0xff]
    %v973 = vld [vmem:[#allocation8 + $0x280] sm:$0xff]
    %v974 = vld [vmem:[#allocation8 + $0x288] sm:$0xff]
    %v975 = vld [vmem:[#allocation8 + $0x290] sm:$0xff]
    %v976 = vld [vmem:[#allocation8 + $0x298] sm:$0xff]
    %v977 = vld [vmem:[#allocation8 + $0x2a0] sm:$0xff]
    %v978 = vld [vmem:[#allocation8 + $0x2a8] sm:$0xff]
    %v979 = vld [vmem:[#allocation8 + $0x2b0] sm:$0xff]
    %v980 = vld [vmem:[#allocation8 + $0x2b8] sm:$0xff]
    %v981 = vld [vmem:[#allocation8 + $0x2c0] sm:$0xff]
    %v982 = vld [vmem:[#allocation8 + $0x2c8] sm:$0xff]
    %v983 = vld [vmem:[#allocation8 + $0x2d0] sm:$0xff]
    %v984 = vld [vmem:[#allocation8 + $0x2d8] sm:$0xff]
    %v985 = vld [vmem:[#allocation8 + $0x2e0] sm:$0xff]
    %v986 = vld [vmem:[#allocation8 + $0x2e8] sm:$0xff]
    %v987 = vld [vmem:[#allocation8 + $0x2f0] sm:$0xff]
    %v988 = vld [vmem:[#allocation8 + $0x2f8] sm:$0xff]
    %v989 = vld [vmem:[#allocation8 + $0x300] sm:$0xff]
    %v990 = vld [vmem:[#allocation8 + $0x308] sm:$0xff]
    %v991 = vld [vmem:[#allocation8 + $0x310] sm:$0xff]
    %v992 = vld [vmem:[#allocation8 + $0x318] sm:$0xff]
    %v993 = vld [vmem:[#allocation8 + $0x320] sm:$0xff]
    %v994 = vld [vmem:[#allocation8 + $0x328] sm:$0xff]
    %v995 = vld [vmem:[#allocation8 + $0x330] sm:$0xff]
    %v996 = vld [vmem:[#allocation8 + $0x338] sm:$0xff]
    %v997 = vld [vmem:[#allocation8 + $0x340] sm:$0xff]
    %v998 = vld [vmem:[#allocation8 + $0x348] sm:$0xff]
    %v999 = vld [vmem:[#allocation8 + $0x350] sm:$0xff]
    %v1000 = vld [vmem:[#allocation8 + $0x358] sm:$0xff]
    %v1001 = vld [vmem:[#allocation8 + $0x360] sm:$0xff]
    %v1002 = vld [vmem:[#allocation8 + $0x368] sm:$0xff]
    %v1003 = vld [vmem:[#allocation8 + $0x370] sm:$0xff]
    %v1004 = vld [vmem:[#allocation8 + $0x378] sm:$0xff]
    %v1005 = vld [vmem:[#allocation8 + $0x380] sm:$0xff]
    %v1006 = vld [vmem:[#allocation8 + $0x388] sm:$0xff]
    %v1007 = vld [vmem:[#allocation8 + $0x390] sm:$0xff]
    %v1008 = vld [vmem:[#allocation8 + $0x398] sm:$0xff]
    %v1009 = vld [vmem:[#allocation8 + $0x3a0] sm:$0xff]
    %v1010 = vld [vmem:[#allocation8 + $0x3a8] sm:$0xff]
    %v1011 = vld [vmem:[#allocation8 + $0x3b0] sm:$0xff]
    %v1012 = vld [vmem:[#allocation8 + $0x3b8] sm:$0xff]
    %v1013 = vld [vmem:[#allocation8 + $0x3c0] sm:$0xff]
    %v1014 = vld [vmem:[#allocation8 + $0x3c8] sm:$0xff]
    %v1015 = vld [vmem:[#allocation8 + $0x3d0] sm:$0xff]
    %v1016 = vld [vmem:[#allocation8 + $0x3d8] sm:$0xff]
    %v1017 = vld [vmem:[#allocation8 + $0x3e0] sm:$0xff]
    %v1018 = vld [vmem:[#allocation8 + $0x3e8] sm:$0xff]
    %v1019 = vld [vmem:[#allocation8 + $0x3f0] sm:$0xff]
    %v1020 = vld [vmem:[#allocation8 + $0x3f8] sm:$0xff]
    %v1021 = vld [vmem:[%s4] sm:$0x1]
    %v1023 = vlaneseq
    %v1024 = vshrl.u32 %v1023, 7
    %v1025 = vsub.s32 0, %v1024
    %v1026 = vrot.slane %v1021, %v1025
    %1028 = vmatprep.subr.mxu0 0.0
    %1029 = vmatpush1.msra.mxu0 %v908
    %1030 = vmatprep.subr.mxu0 0.0
    %1031 = vmatpush1.msra.mxu0 %v907
    %1032 = vmatprep.subr.mxu0 0.0
    %1033 = vmatpush1.msra.mxu0 %v906
    %1034 = vmatprep.subr.mxu0 0.0
    %1035 = vmatpush1.msra.mxu0 %v905
    %1036 = vmatprep.subr.mxu0 0.0
    %1037 = vmatpush1.msra.mxu0 %v904
    %1038 = vmatprep.subr.mxu0 0.0
    %1039 = vmatpush1.msra.mxu0 %v903
    %1040 = vmatprep.subr.mxu0 0.0
    %1041 = vmatpush1.msra.mxu0 %v902
    %1042 = vmatprep.subr.mxu0 0.0
    %1043 = vmatpush1.msra.mxu0 %v901
    %1044 = vmatprep.subr.mxu0 0.0
    %1045 = vmatpush1.msra.mxu0 %v900
    %1046 = vmatprep.subr.mxu0 0.0
    %1047 = vmatpush1.msra.mxu0 %v899
    %1048 = vmatprep.subr.mxu0 0.0
    %1049 = vmatpush1.msra.mxu0 %v898
    %1050 = vmatprep.subr.mxu0 0.0
    %1051 = vmatpush1.msra.mxu0 %v897
    %1052 = vmatprep.subr.mxu0 0.0
    %1053 = vmatpush1.msra.mxu0 %v896
    %1054 = vmatprep.subr.mxu0 0.0
    %1055 = vmatpush1.msra.mxu0 %v895
    %1056 = vmatprep.subr.mxu0 0.0
    %1057 = vmatpush1.msra.mxu0 %v894
    %1058 = vmatprep.subr.mxu0 0.0
    %1059 = vmatpush1.msra.mxu0 %v893
    %1060 = vmatprep.subr.mxu0 0.0
    %1061 = vmatpush2.msra.mxu0 %v924
    %1062 = vmatprep.subr.mxu0 0.0
    %1063 = vmatpush2.msra.mxu0 %v923
    %1064 = vmatprep.subr.mxu0 0.0
    %1065 = vmatpush2.msra.mxu0 %v922
    %1066 = vmatprep.subr.mxu0 0.0
    %1067 = vmatpush2.msra.mxu0 %v921
    %1068 = vmatprep.subr.mxu0 0.0
    %1069 = vmatpush2.msra.mxu0 %v920
    %1070 = vmatprep.subr.mxu0 0.0
    %1071 = vmatpush2.msra.mxu0 %v919
    %1072 = vmatprep.subr.mxu0 0.0
    %1073 = vmatpush2.msra.mxu0 %v918
    %1074 = vmatprep.subr.mxu0 0.0
    %1075 = vmatpush2.msra.mxu0 %v917
    %1076 = vmatprep.subr.mxu0 0.0
    %1077 = vmatpush2.msra.mxu0 %v916
    %1078 = vmatprep.subr.mxu0 0.0
    %1079 = vmatpush2.msra.mxu0 %v915
    %1080 = vmatprep.subr.mxu0 0.0
    %1081 = vmatpush2.msra.mxu0 %v914
    %1082 = vmatprep.subr.mxu0 0.0
    %1083 = vmatpush2.msra.mxu0 %v913
    %1084 = vmatprep.subr.mxu0 0.0
    %1085 = vmatpush2.msra.mxu0 %v912
    %1086 = vmatprep.subr.mxu0 0.0
    %1087 = vmatpush2.msra.mxu0 %v911
    %1088 = vmatprep.subr.mxu0 0.0
    %1089 = vmatpush2.msra.mxu0 %v910
    %1090 = vmatprep.subr.mxu0 0.0
    %1091 = vmatpush2.msra.mxu0 %v909
    %1092 = vmatprep.mubr.f32.mxu0 %v886
    %1093 = vmatmul.mubr.f32.gmra.mxu0 %v885
    %v1094 = vpop.f32.mrf.mxu0
    %v1095 = vadd.f32 %v1026, %v1094
    %v1096 = vpop.f32.mrf.mxu0
    %1097 = vdwg.mxu0
    %1098 = vmatprep.subr.mxu0 0.0
    %1099 = vmatpush1.msra.mxu0 %v940
    %1100 = vmatprep.subr.mxu0 0.0
    %1101 = vmatpush1.msra.mxu0 %v939
    %1102 = vmatprep.subr.mxu0 0.0
    %1103 = vmatpush1.msra.mxu0 %v938
    %1104 = vmatprep.subr.mxu0 0.0
    %1105 = vmatpush1.msra.mxu0 %v937
    %1106 = vmatprep.subr.mxu0 0.0
    %1107 = vmatpush1.msra.mxu0 %v936
    %1108 = vmatprep.subr.mxu0 0.0
    %1109 = vmatpush1.msra.mxu0 %v935
    %1110 = vmatprep.subr.mxu0 0.0
    %1111 = vmatpush1.msra.mxu0 %v934
    %1112 = vmatprep.subr.mxu0 0.0
    %1113 = vmatpush1.msra.mxu0 %v933
    %1114 = vmatprep.subr.mxu0 0.0
    %1115 = vmatpush1.msra.mxu0 %v932
    %1116 = vmatprep.subr.mxu0 0.0
    %1117 = vmatpush1.msra.mxu0 %v931
    %1118 = vmatprep.subr.mxu0 0.0
    %1119 = vmatpush1.msra.mxu0 %v930
    %1120 = vmatprep.subr.mxu0 0.0
    %1121 = vmatpush1.msra.mxu0 %v929
    %1122 = vmatprep.subr.mxu0 0.0
    %1123 = vmatpush1.msra.mxu0 %v928
    %1124 = vmatprep.subr.mxu0 0.0
    %1125 = vmatpush1.msra.mxu0 %v927
    %1126 = vmatprep.subr.mxu0 0.0
    %1127 = vmatpush1.msra.mxu0 %v926
    %1128 = vmatprep.subr.mxu0 0.0
    %1129 = vmatpush1.msra.mxu0 %v925
    %1130 = vmatprep.subr.mxu0 0.0
    %1131 = vmatpush2.msra.mxu0 %v956
    %1132 = vmatprep.subr.mxu0 0.0
    %1133 = vmatpush2.msra.mxu0 %v955
    %1134 = vmatprep.subr.mxu0 0.0
    %1135 = vmatpush2.msra.mxu0 %v954
    %1136 = vmatprep.subr.mxu0 0.0
    %1137 = vmatpush2.msra.mxu0 %v953
    %1138 = vmatprep.subr.mxu0 0.0
    %1139 = vmatpush2.msra.mxu0 %v952
    %1140 = vmatprep.subr.mxu0 0.0
    %1141 = vmatpush2.msra.mxu0 %v951
    %1142 = vmatprep.subr.mxu0 0.0
    %1143 = vmatpush2.msra.mxu0 %v950
    %1144 = vmatprep.subr.mxu0 0.0
    %1145 = vmatpush2.msra.mxu0 %v949
    %1146 = vmatprep.subr.mxu0 0.0
    %1147 = vmatpush2.msra.mxu0 %v948
    %1148 = vmatprep.subr.mxu0 0.0
    %1149 = vmatpush2.msra.mxu0 %v947
    %1150 = vmatprep.subr.mxu0 0.0
    %1151 = vmatpush2.msra.mxu0 %v946
    %1152 = vmatprep.subr.mxu0 0.0
    %1153 = vmatpush2.msra.mxu0 %v945
    %1154 = vmatprep.subr.mxu0 0.0
    %1155 = vmatpush2.msra.mxu0 %v944
    %1156 = vmatprep.subr.mxu0 0.0
    %1157 = vmatpush2.msra.mxu0 %v943
    %1158 = vmatprep.subr.mxu0 0.0
    %1159 = vmatpush2.msra.mxu0 %v942
    %1160 = vmatprep.subr.mxu0 0.0
    %1161 = vmatpush2.msra.mxu0 %v941
    %1162 = vmatprep.mubr.f32.mxu0 %v888
    %1163 = vmatmul.mubr.f32.gmra.mxu0 %v887
    %v1164 = vpop.f32.mrf.mxu0
    %v1165 = vadd.f32 %v1095, %v1164
    %v1166 = vpop.f32.mrf.mxu0
    %1167 = vdwg.mxu0
    %1168 = vmatprep.subr.mxu0 0.0
    %1169 = vmatpush1.msra.mxu0 %v972
    %1170 = vmatprep.subr.mxu0 0.0
    %1171 = vmatpush1.msra.mxu0 %v971
    %1172 = vmatprep.subr.mxu0 0.0
    %1173 = vmatpush1.msra.mxu0 %v970
    %1174 = vmatprep.subr.mxu0 0.0
    %1175 = vmatpush1.msra.mxu0 %v969
    %1176 = vmatprep.subr.mxu0 0.0
    %1177 = vmatpush1.msra.mxu0 %v968
    %1178 = vmatprep.subr.mxu0 0.0
    %1179 = vmatpush1.msra.mxu0 %v967
    %1180 = vmatprep.subr.mxu0 0.0
    %1181 = vmatpush1.msra.mxu0 %v966
    %1182 = vmatprep.subr.mxu0 0.0
    %1183 = vmatpush1.msra.mxu0 %v965
    %1184 = vmatprep.subr.mxu0 0.0
    %1185 = vmatpush1.msra.mxu0 %v964
    %1186 = vmatprep.subr.mxu0 0.0
    %1187 = vmatpush1.msra.mxu0 %v963
    %1188 = vmatprep.subr.mxu0 0.0
    %1189 = vmatpush1.msra.mxu0 %v962
    %1190 = vmatprep.subr.mxu0 0.0
    %1191 = vmatpush1.msra.mxu0 %v961
    %1192 = vmatprep.subr.mxu0 0.0
    %1193 = vmatpush1.msra.mxu0 %v960
    %1194 = vmatprep.subr.mxu0 0.0
    %1195 = vmatpush1.msra.mxu0 %v959
    %1196 = vmatprep.subr.mxu0 0.0
    %1197 = vmatpush1.msra.mxu0 %v958
    %1198 = vmatprep.subr.mxu0 0.0
    %1199 = vmatpush1.msra.mxu0 %v957
    %1200 = vmatprep.subr.mxu0 0.0
    %1201 = vmatpush2.msra.mxu0 %v988
    %1202 = vmatprep.subr.mxu0 0.0
    %1203 = vmatpush2.msra.mxu0 %v987
    %1204 = vmatprep.subr.mxu0 0.0
    %1205 = vmatpush2.msra.mxu0 %v986
    %1206 = vmatprep.subr.mxu0 0.0
    %1207 = vmatpush2.msra.mxu0 %v985
    %1208 = vmatprep.subr.mxu0 0.0
    %1209 = vmatpush2.msra.mxu0 %v984
    %1210 = vmatprep.subr.mxu0 0.0
    %1211 = vmatpush2.msra.mxu0 %v983
    %1212 = vmatprep.subr.mxu0 0.0
    %1213 = vmatpush2.msra.mxu0 %v982
    %1214 = vmatprep.subr.mxu0 0.0
    %1215 = vmatpush2.msra.mxu0 %v981
    %1216 = vmatprep.subr.mxu0 0.0
    %1217 = vmatpush2.msra.mxu0 %v980
    %1218 = vmatprep.subr.mxu0 0.0
    %1219 = vmatpush2.msra.mxu0 %v979
    %1220 = vmatprep.subr.mxu0 0.0
    %1221 = vmatpush2.msra.mxu0 %v978
    %1222 = vmatprep.subr.mxu0 0.0
    %1223 = vmatpush2.msra.mxu0 %v977
    %1224 = vmatprep.subr.mxu0 0.0
    %1225 = vmatpush2.msra.mxu0 %v976
    %1226 = vmatprep.subr.mxu0 0.0
    %1227 = vmatpush2.msra.mxu0 %v975
    %1228 = vmatprep.subr.mxu0 0.0
    %1229 = vmatpush2.msra.mxu0 %v974
    %1230 = vmatprep.subr.mxu0 0.0
    %1231 = vmatpush2.msra.mxu0 %v973
    %1232 = vmatprep.mubr.f32.mxu0 %v890
    %1233 = vmatmul.mubr.f32.gmra.mxu0 %v889
    %v1234 = vpop.f32.mrf.mxu0
    %v1235 = vadd.f32 %v1165, %v1234
    %v1236 = vpop.f32.mrf.mxu0
    %1237 = vdwg.mxu0
    %1238 = vmatprep.subr.mxu0 0.0
    %1239 = vmatpush1.msra.mxu0 %v1004
    %1240 = vmatprep.subr.mxu0 0.0
    %1241 = vmatpush1.msra.mxu0 %v1003
    %1242 = vmatprep.subr.mxu0 0.0
    %1243 = vmatpush1.msra.mxu0 %v1002
    %1244 = vmatprep.subr.mxu0 0.0
    %1245 = vmatpush1.msra.mxu0 %v1001
    %1246 = vmatprep.subr.mxu0 0.0
    %1247 = vmatpush1.msra.mxu0 %v1000
    %1248 = vmatprep.subr.mxu0 0.0
    %1249 = vmatpush1.msra.mxu0 %v999
    %1250 = vmatprep.subr.mxu0 0.0
    %1251 = vmatpush1.msra.mxu0 %v998
    %1252 = vmatprep.subr.mxu0 0.0
    %1253 = vmatpush1.msra.mxu0 %v997
    %1254 = vmatprep.subr.mxu0 0.0
    %1255 = vmatpush1.msra.mxu0 %v996
    %1256 = vmatprep.subr.mxu0 0.0
    %1257 = vmatpush1.msra.mxu0 %v995
    %1258 = vmatprep.subr.mxu0 0.0
    %1259 = vmatpush1.msra.mxu0 %v994
    %1260 = vmatprep.subr.mxu0 0.0
    %1261 = vmatpush1.msra.mxu0 %v993
    %1262 = vmatprep.subr.mxu0 0.0
    %1263 = vmatpush1.msra.mxu0 %v992
    %1264 = vmatprep.subr.mxu0 0.0
    %1265 = vmatpush1.msra.mxu0 %v991
    %1266 = vmatprep.subr.mxu0 0.0
    %1267 = vmatpush1.msra.mxu0 %v990
    %1268 = vmatprep.subr.mxu0 0.0
    %1269 = vmatpush1.msra.mxu0 %v989
    %1270 = vmatprep.subr.mxu0 0.0
    %1271 = vmatpush2.msra.mxu0 %v1020
    %1272 = vmatprep.subr.mxu0 0.0
    %1273 = vmatpush2.msra.mxu0 %v1019
    %1274 = vmatprep.subr.mxu0 0.0
    %1275 = vmatpush2.msra.mxu0 %v1018
    %1276 = vmatprep.subr.mxu0 0.0
    %1277 = vmatpush2.msra.mxu0 %v1017
    %1278 = vmatprep.subr.mxu0 0.0
    %1279 = vmatpush2.msra.mxu0 %v1016
    %1280 = vmatprep.subr.mxu0 0.0
    %1281 = vmatpush2.msra.mxu0 %v1015
    %1282 = vmatprep.subr.mxu0 0.0
    %1283 = vmatpush2.msra.mxu0 %v1014
    %1284 = vmatprep.subr.mxu0 0.0
    %1285 = vmatpush2.msra.mxu0 %v1013
    %1286 = vmatprep.subr.mxu0 0.0
    %1287 = vmatpush2.msra.mxu0 %v1012
    %1288 = vmatprep.subr.mxu0 0.0
    %1289 = vmatpush2.msra.mxu0 %v1011
    %1290 = vmatprep.subr.mxu0 0.0
    %1291 = vmatpush2.msra.mxu0 %v1010
    %1292 = vmatprep.subr.mxu0 0.0
    %1293 = vmatpush2.msra.mxu0 %v1009
    %1294 = vmatprep.subr.mxu0 0.0
    %1295 = vmatpush2.msra.mxu0 %v1008
    %1296 = vmatprep.subr.mxu0 0.0
    %1297 = vmatpush2.msra.mxu0 %v1007
    %1298 = vmatprep.subr.mxu0 0.0
    %1299 = vmatpush2.msra.mxu0 %v1006
    %1300 = vmatprep.subr.mxu0 0.0
    %1301 = vmatpush2.msra.mxu0 %v1005
    %1302 = vmatprep.mubr.f32.mxu0 %v892
    %1303 = vmatmul.mubr.f32.gmra.mxu0 %v891
    %v1304 = vpop.f32.mrf.mxu0
    %v1305 = vadd.f32 %v1235, %v1304
    %v1306 = vpop.f32.mrf.mxu0
    %1307 = vdwg.mxu0
    %v1308 = vlaneseq
    %v1309 = vand.u32 %v1308, 127
    %vm1310 = vcmp.lt.s32.totalorder %v1309, 5
    %v1311 = vsel %vm1310, %v1305, -1e+30
    %1312 = vmax.xlane.f32.xlu0 %v1311
    %v1313 = vpop.xlane.xlu0 %1312
    %v1314 = vsub.f32 %v1305, %v1313
    %v1315 = vmul.f32 %v1314, 1.442695
    %v1316 = vpow.pop %v1315
    %v1317 = vsel %vm1310, %v1316, 0.0
    %1318 = vadd.xlane.f32.xlu0 %v1317
    %v1319 = vpop.xlane.xlu0 %1318
    %v1320 = vrcp.pop %v1319
    %v1321 = vmul.f32 %v1317, %v1320
    %1322 = vst [vmem:[#allocation10] sm:$0xff] %v1321
    %v1323 = vsel %vm1310, %v1321, -1e+30
    %1324 = vmax.xlane.f32.xlu0 %v1323
    %v1325 = vpop.xlane.xlu0 %1324
    %v1326 = vsub.f32 %v1321, %v1325
    %v1327 = vmul.f32 %v1326, 1.442695
    %v1328 = vpow.pop %v1327
    %v1329 = vsel %vm1310, %v1328, 0.0
    %1330 = vadd.xlane.f32.xlu0 %v1329
    %v1331 = vpop.xlane.xlu0 %1330
    %v1332 = vlog2.pop %v1331
    %v1333 = vmul.f32 %v1332, 0.6931472
    %v1334 = vadd.f32 %v1325, %v1333
    %v1335 = vsub.f32 %v1321, %v1334
    %v1336 = vld [vmem:[%s5] sm:$0xff]
    %v1337 = vmul.f32 %v1336, %v1335
    %1338 = vadd.xlane.f32.xlu0 %v1337
    %v1339 = vpop.xlane.xlu0 %1338
    %v1340 = vsub.f32 0.0, %v1339
    %1341 = vst [vmem:[#allocation11] sm:$0xff] %v1340
    // Predicated region
    $region42: #{tpu_custom_call.1} parent=1 // pred_check
      _
    $region43: #{tpu_custom_call.1} parent=1 // pred_check_branch
      %1343 = sbr.rel (0) target = $region45
    $region44: #{tpu_custom_call.1} parent=1 // pred_region
      %s1345 = ssub.s32 128, 128
      %1346 = vsyncadd [#allocation4], %s1345
      %s1348 = sshll.u32 [#allocation10], 4
      %s1349 = int_to_ptr.vmem [resolvable:$true] %s1348
      %1351 = dma.vmem_to_hbm [thread:$0]  %s1349, 128, %s6, [#allocation4]
    $region45: #{tpu_custom_call.1} parent=1 // pred_fallthru
      _
    // Predicated region
    $region46: #{tpu_custom_call.1} parent=1 // pred_check
      _
    $region47: #{tpu_custom_call.1} parent=1 // pred_check_branch
      %1353 = sbr.rel (0) target = $region49
    $region48: #{tpu_custom_call.1} parent=1 // pred_region
      %s1355 = ssub.s32 128, 128
      %1356 = vsyncadd [#allocation12], %s1355
      %s1358 = sshll.u32 [#allocation11], 4
      %s1359 = int_to_ptr.vmem [resolvable:$true] %s1358
      %1361 = dma.vmem_to_hbm [thread:$0]  %s1359, 128, %s7, [#allocation12]
    $region49: #{tpu_custom_call.1} parent=1 // pred_fallthru
      _
    // Predicated region
    $region50: #{tpu_custom_call.1} parent=1 // pred_check
      _
    $region51: #{tpu_custom_call.1} parent=1 // pred_check_branch
      %1363 = sbr.rel (0) target = $region53
    $region52: #{tpu_custom_call.1} parent=1 // pred_region
      %1364 = dma.done [#allocation4], 128
    $region53: #{tpu_custom_call.1} parent=1 // pred_fallthru
      _
    // Predicated region
    $region54: #{tpu_custom_call.1} parent=1 // pred_check
      _
    $region55: #{tpu_custom_call.1} parent=1 // pred_check_branch
      %1366 = sbr.rel (0) target = $region57
    $region56: #{tpu_custom_call.1} parent=1 // pred_region
      %1367 = dma.done [#allocation12], 128
    $region57: #{tpu_custom_call.1} parent=1 // pred_fallthru
      _
    %1368 = vsyncpa [#allocation3], 1
    %1369 = vsyncpa [#allocation6], 1
    %1370 = vsyncpa [#allocation9], 1
    %1371 = vsyncpa [#allocation4], 1
    %1372 = vsyncpa [#allocation12], 1

</llo_original>
